<compile_context>
chip_gen: v5e
topology: v5e:2x2
jax: 0.10.0
libtpu: 0.0.40
codegen_flags: <defaults>
</compile_context>

<pallas_src>
import functools
import math

import jax
import jax.numpy as jnp
from jax.experimental import pallas as pl
from jax.experimental.pallas import tpu as pltpu

_LN_EPS = 1e-5  # torch.nn.LayerNorm default


def _erf(z):
    # Abramowitz & Stegun 7.1.26 (|err| < 1.5e-7): exp/mul/add/select only, so it
    # lowers on Mosaic; the divide goes to the EUP via pl.reciprocal.
    a = jnp.abs(z)
    t = pl.reciprocal(1.0 + 0.3275911 * a, approx=True)
    poly = t * (0.254829592 + t * (-0.284496736 + t * (1.421413741
             + t * (-1.453152027 + t * 1.061405429))))
    e = 1.0 - poly * jnp.exp(-a * a)
    return jnp.where(z >= 0.0, e, -e)


def _gelu_exact(x):
    # torch.nn.GELU() default = exact erf formulation.
    return 0.5 * x * (1.0 + _erf(x * 0.7071067811865476))


# --------------------------- fused Bert kernel ------------------------------

def _bert_kernel(x_ref, wqkv_ref, bqkv_ref, wo_ref, bo_ref,
                 lnw_ref, lnb_ref, w1_ref, b1_ref, w2_ref, b2_ref,
                 wc_ref, bc_ref, out_ref, qkv_scr, attn_scr, *, num_heads):
    S, D = x_ref.shape
    H = num_heads
    dk = D // H
    R = S // H  # original rows owned by each head under the transpose-free .view

    x = x_ref[...]                                   # (S, D) f32 embeddings
    x_bf = x.astype(jnp.bfloat16)

    # ---- QKV projection: ONE (S,D)x(D,3D) bf16 MXU matmul (hoisted). ----------
    # Columns are interleaved per lane-block c as [Qc|Kc|Vc]; 1/sqrt(dk) is
    # already folded into the Q columns/bias.
    qkv = jnp.dot(x_bf, wqkv_ref[...],
                  preferred_element_type=jnp.float32) + bqkv_ref[...]   # (S, 3D)

    # ---- multi-head attention, faithful to the reference's transpose-free
    # Q.view(B,H,S,dk): head h owns original rows [h*R,(h+1)*R), each split into
    # H lane-blocks of width dk.  Per head we shuffle those blocks into a
    # (S, 3*dk) scratch (row order (c, r) — a fixed permutation softmax(QK^T)V
    # is invariant to), run ONE score matmul + ONE PV matmul, and un-permute the
    # (S, dk) result into the (S, D) attention scratch.
    # TODO(synk): at real H/S, replace the unrolled Python loop with
    # lax.fori_loop(..., unroll=True) to bound vreg live ranges.
    for h in range(H):
        for c in range(H):
            qkv_scr[c * R:(c + 1) * R, :] = \
                qkv[h * R:(h + 1) * R, c * 3 * dk:(c + 1) * 3 * dk]
        blk = qkv_scr[...]                            # (S, 3*dk) f32
        qh = blk[:, 0:dk].astype(jnp.bfloat16)        # scaled Q, (S, dk)
        kh = blk[:, dk:2 * dk].astype(jnp.bfloat16)
        vh = blk[:, 2 * dk:3 * dk].astype(jnp.bfloat16)
        # scores: contract on dk (MXU takes the transposed operand directly).
        sc = jax.lax.dot_general(qh, kh, (((1,), (1,)), ((), ())),
                                 preferred_element_type=jnp.float32)    # (S, S)
        m = jnp.max(sc, axis=1, keepdims=True)
        e = jnp.exp(sc - m)
        p = e * pl.reciprocal(jnp.sum(e, axis=1, keepdims=True), approx=True)
        ah = jnp.dot(p.astype(jnp.bfloat16), vh,
                     preferred_element_type=jnp.float32)                # (S, dk)
        for c in range(H):                            # undo the (c, r) permutation
            attn_scr[h * R:(h + 1) * R, c * dk:(c + 1) * dk] = \
                ah[c * R:(c + 1) * R, :]

    o = jnp.dot(attn_scr[...].astype(jnp.bfloat16), wo_ref[...],
                preferred_element_type=jnp.float32) + bo_ref[...]       # (S, D)
    # TODO(synk): nn.Dropout(0.1) after o_proj is stochastic; identity (eval mode).

    # ---- encoder block: residual + LayerNorm, FFN(GELU), residual + LayerNorm --
    lnw = lnw_ref[...]
    lnb = lnb_ref[...]

    def layer_norm(v):                                # element-wise math stays f32
        mu = jnp.mean(v, axis=1, keepdims=True)
        cen = v - mu
        var = jnp.mean(cen * cen, axis=1, keepdims=True)
        return cen * jax.lax.rsqrt(var + _LN_EPS) * lnw + lnb

    h1 = layer_norm(x + o)
    hid = jnp.dot(h1.astype(jnp.bfloat16), w1_ref[...],
                  preferred_element_type=jnp.float32) + b1_ref[...]     # (S, 4D)
    hid = _gelu_exact(hid)
    ffn = jnp.dot(hid.astype(jnp.bfloat16), w2_ref[...],
                  preferred_element_type=jnp.float32) + b2_ref[...]
    h2 = layer_norm(h1 + ffn)                         # the block re-uses ONE LayerNorm

    # ---- classification head (lane-dense: wc/bc zero-padded to 128 cols) ------
    logits = jnp.dot(h2.astype(jnp.bfloat16), wc_ref[...],
                     preferred_element_type=jnp.float32) + bc_ref[...]
    out_ref[...] = logits.astype(out_ref.dtype)


# ------------------------------- wrapper -------------------------------------

def _interleave_cols(mats, dk):
    """Interleave dk-wide output-column blocks of several (..., D) matrices as
    [m0_blk0 | m1_blk0 | m2_blk0 | m0_blk1 | ...] along the last axis."""
    D = mats[0].shape[-1]
    cols = []
    for c in range(D // dk):
        for m in mats:
            cols.append(m[..., c * dk:(c + 1) * dk])
    return jnp.concatenate(cols, axis=-1)


def bert_forward(token_ids, pos_ids, params, num_heads):
    """Bert forward: embeddings gathered in XLA, everything else in ONE fused
    pallas_call gridded over batch."""
    tok_emb = params["tok_emb"]
    pos_emb = params["pos_emb"]
    # Embedding lookup is a gather -> do it in the wrapper, not as one-hot matmuls.
    x = tok_emb[token_ids] + pos_emb[pos_ids]         # (B, S, D) f32

    B, S, D = x.shape
    H = num_heads
    dk = D // H
    dff = params["w1"].shape[1]
    L = params["wc"].shape[1]
    LP = ((L + 127) // 128) * 128                     # lane-dense classifier slab
    assert D % H == 0 and S % H == 0, "kernel assumes H | D and H | S"

    # Fuse/interleave QKV weights; fold 1/sqrt(dk) into the Q columns.  bf16 for MXU.
    scale = 1.0 / math.sqrt(dk)
    wqkv = _interleave_cols([params["wq"] * scale, params["wk"], params["wv"]],
                            dk).astype(jnp.bfloat16)                  # (D, 3D)
    bqkv = _interleave_cols([params["bq"] * scale, params["bk"], params["bv"]],
                            dk)                                       # (1, 3D) f32

    wc_pad = jnp.pad(params["wc"], ((0, 0), (0, LP - L))).astype(jnp.bfloat16)
    bc_pad = jnp.pad(params["bc"], ((0, 0), (0, LP - L)))             # f32

    operands = (x, wqkv, bqkv,
                params["wo"].astype(jnp.bfloat16), params["bo"],
                params["ln_w"], params["ln_b"],
                params["w1"].astype(jnp.bfloat16), params["b1"],
                params["w2"].astype(jnp.bfloat16), params["b2"],
                wc_pad, bc_pad)

    def const2d(a):   # whole weight resident in VMEM; same block every grid step
        return pl.BlockSpec(a.shape, lambda b: (0, 0))

    in_specs = [pl.BlockSpec((None, S, D), lambda b: (b, 0, 0))] + \
               [const2d(a) for a in operands[1:]]

    flops = (2 * B * S * D * 3 * D            # fused QKV projection
             + 2 * B * H * S * S * dk * 2     # scores + probs @ V
             + 2 * B * S * D * D              # output projection
             + 2 * B * S * D * dff * 2        # FFN
             + 2 * B * S * D * LP)            # cls head
    transcendentals = B * H * S * S + 2 * B * S * dff
    bytes_accessed = sum(int(a.size) * a.dtype.itemsize for a in operands) \
        + B * S * LP * 4
    # Footprint-derived VMEM limit with generous headroom (weights are tiny here).
    vmem_limit = int(min(max(8 * bytes_accessed, 16 * 1024 * 1024),
                         64 * 1024 * 1024))

    out = pl.pallas_call(
        functools.partial(_bert_kernel, num_heads=H),
        out_shape=jax.ShapeDtypeStruct((B, S, LP), jnp.float32),
        grid=(B,),
        in_specs=in_specs,
        out_specs=pl.BlockSpec((None, S, LP), lambda b: (b, 0, 0)),
        scratch_shapes=[pltpu.VMEM((S, 3 * dk), jnp.float32),   # per-head QKV shuffle
                        pltpu.VMEM((S, D), jnp.float32)],       # attention output
        compiler_params=pltpu.CompilerParams(
            dimension_semantics=("parallel",),   # batch axis: megacore / both v7x TCs
            vmem_limit_bytes=vmem_limit),
        cost_estimate=pl.CostEstimate(flops=flops,
                                      transcendentals=transcendentals,
                                      bytes_accessed=bytes_accessed),
    )(*operands)
    return out[:, :, :L]


# --------------------------- params + reference -----------------------------

def init_params(key, vocab_size, max_pos, d_model, num_labels):
    dff = 4 * d_model
    ks = jax.random.split(key, 16)

    def lin(kw, kb, fan_in, fan_out):
        bound = 1.0 / math.sqrt(fan_in)  # torch.nn.Linear default init range
        w = jax.random.uniform(kw, (fan_in, fan_out), jnp.float32, -bound, bound)
        b = jax.random.uniform(kb, (1, fan_out), jnp.float32, -bound, bound)
        return w, b

    p = {}
    p["tok_emb"] = jax.random.normal(ks[0], (vocab_size, d_model), jnp.float32)
    p["pos_emb"] = jax.random.normal(ks[1], (max_pos, d_model), jnp.float32)
    p["wq"], p["bq"] = lin(ks[2], ks[3], d_model, d_model)
    p["wk"], p["bk"] = lin(ks[4], ks[5], d_model, d_model)
    p["wv"], p["bv"] = lin(ks[6], ks[7], d_model, d_model)
    p["wo"], p["bo"] = lin(ks[8], ks[9], d_model, d_model)
    p["ln_w"] = jnp.ones((1, d_model), jnp.float32)
    p["ln_b"] = jnp.zeros((1, d_model), jnp.float32)
    p["w1"], p["b1"] = lin(ks[10], ks[11], d_model, dff)
    p["w2"], p["b2"] = lin(ks[12], ks[13], dff, d_model)
    p["wc"], p["bc"] = lin(ks[14], ks[15], d_model, num_labels)
    return p


def reference_forward(token_ids, pos_ids, params, num_heads):
    """Pure-JAX f32 reference mirroring the PyTorch Bert forward (mask=None, eval)."""
    x = params["tok_emb"][token_ids] + params["pos_emb"][pos_ids]
    B, S, D = x.shape
    dk = D // num_heads
    q = (x @ params["wq"] + params["bq"]).reshape(B, num_heads, S, dk)
    k = (x @ params["wk"] + params["bk"]).reshape(B, num_heads, S, dk)
    v = (x @ params["wv"] + params["bv"]).reshape(B, num_heads, S, dk)
    s = jnp.einsum("bhqd,bhkd->bhqk", q, k) / math.sqrt(dk)
    p = jax.nn.softmax(s, axis=-1)
    attn = jnp.einsum("bhqk,bhkd->bhqd", p, v).reshape(B, S, D)
    o = attn @ params["wo"] + params["bo"]

    def ln(v_):
        mu = v_.mean(-1, keepdims=True)
        var = ((v_ - mu) ** 2).mean(-1, keepdims=True)
        return (v_ - mu) / jnp.sqrt(var + _LN_EPS) * params["ln_w"] + params["ln_b"]

    h1 = ln(x + o)
    f = jax.nn.gelu(h1 @ params["w1"] + params["b1"], approximate=False) \
        @ params["w2"] + params["b2"]
    h2 = ln(h1 + f)
    return h2 @ params["wc"] + params["bc"]


# --------------------------------- main --------------------------------------

if __name__ == "__main__":
    B, S, D, H = 2, 8, 32, 4
    VOCAB, MAX_POS, NUM_LABELS = 50, 100, 3   # len(label_list) undefined in spec -> 3

    key = jax.random.PRNGKey(0)
    k_tok, k_par = jax.random.split(key)
    token_ids = jax.random.randint(k_tok, (B, S), 0, VOCAB, dtype=jnp.int32)
    pos_ids = jnp.tile(jnp.arange(S, dtype=jnp.int32)[None, :], (B, 1))
    params = init_params(k_par, VOCAB, MAX_POS, D, NUM_LABELS)

    out = bert_forward(token_ids, pos_ids, params, H)
    out = jax.block_until_ready(out)

    ref = reference_forward(token_ids, pos_ids, params, H)
    assert out.shape == (B, S, NUM_LABELS)
    # bf16 MXU operands (+ approx EUP reciprocal in softmax/erf) vs. the f32
    # reference: tolerance sized for that (typical |err| ~ 3e-3 on O(1) logits).
    err = float(jnp.max(jnp.abs(out - ref)))
    assert jnp.allclose(out, ref, atol=3e-2, rtol=3e-2), f"max abs err {err}"
    print("KERNEL_OK")
</pallas_src>

<mosaic_0001>
module attributes {stable_mosaic.version = 11 : i64} {
  func.func @_bert_kernel(%arg0: i32, %arg1: memref<1x8x32xf32, #tpu.memory_space<vmem>>, %arg2: memref<32x96xbf16, #tpu.memory_space<vmem>>, %arg3: memref<1x96xf32, #tpu.memory_space<vmem>>, %arg4: memref<32x32xbf16, #tpu.memory_space<vmem>>, %arg5: memref<1x32xf32, #tpu.memory_space<vmem>>, %arg6: memref<1x32xf32, #tpu.memory_space<vmem>>, %arg7: memref<1x32xf32, #tpu.memory_space<vmem>>, %arg8: memref<32x128xbf16, #tpu.memory_space<vmem>>, %arg9: memref<1x128xf32, #tpu.memory_space<vmem>>, %arg10: memref<128x32xbf16, #tpu.memory_space<vmem>>, %arg11: memref<1x32xf32, #tpu.memory_space<vmem>>, %arg12: memref<32x128xbf16, #tpu.memory_space<vmem>>, %arg13: memref<1x128xf32, #tpu.memory_space<vmem>>, %arg14: memref<1x8x128xf32, #tpu.memory_space<vmem>>, %arg15: memref<8x24xf32, #tpu.memory_space<vmem>>, %arg16: memref<8x32xf32, #tpu.memory_space<vmem>>) attributes {dimension_semantics = [#tpu.dimension_semantics<parallel>], iteration_bounds = array<i64: 2>, scalar_prefetch = 0 : i64, scratch_operands = 2 : i64, tpu.core_type = #tpu.core_type<tc>, window_params = [{transform_indices = @transform_0, window_bounds = array<i64: 1, 8, 32>}, {pipeline_mode = #tpu.pipeline_mode<synchronous>, transform_indices = @transform_1, window_bounds = array<i64: 32, 96>}, {pipeline_mode = #tpu.pipeline_mode<synchronous>, transform_indices = @transform_2, window_bounds = array<i64: 1, 96>}, {pipeline_mode = #tpu.pipeline_mode<synchronous>, transform_indices = @transform_3, window_bounds = array<i64: 32, 32>}, {pipeline_mode = #tpu.pipeline_mode<synchronous>, transform_indices = @transform_4, window_bounds = array<i64: 1, 32>}, {pipeline_mode = #tpu.pipeline_mode<synchronous>, transform_indices = @transform_5, window_bounds = array<i64: 1, 32>}, {pipeline_mode = #tpu.pipeline_mode<synchronous>, transform_indices = @transform_6, window_bounds = array<i64: 1, 32>}, {pipeline_mode = #tpu.pipeline_mode<synchronous>, transform_indices = @transform_7, window_bounds = array<i64: 32, 128>}, {pipeline_mode = #tpu.pipeline_mode<synchronous>, transform_indices = @transform_8, window_bounds = array<i64: 1, 128>}, {pipeline_mode = #tpu.pipeline_mode<synchronous>, transform_indices = @transform_9, window_bounds = array<i64: 128, 32>}, {pipeline_mode = #tpu.pipeline_mode<synchronous>, transform_indices = @transform_10, window_bounds = array<i64: 1, 32>}, {pipeline_mode = #tpu.pipeline_mode<synchronous>, transform_indices = @transform_11, window_bounds = array<i64: 32, 128>}, {pipeline_mode = #tpu.pipeline_mode<synchronous>, transform_indices = @transform_12, window_bounds = array<i64: 1, 128>}, {transform_indices = @transform_13, window_bounds = array<i64: 1, 8, 128>}]} {
    %c0 = arith.constant 0 : index
    %c0_0 = arith.constant 0 : index
    %c0_1 = arith.constant 0 : index
    %0 = vector.load %arg1[%c0, %c0_0, %c0_1] : memref<1x8x32xf32, #tpu.memory_space<vmem>>, vector<1x8x32xf32>
    %1 = vector.shape_cast %0 : vector<1x8x32xf32> to vector<8x32xf32>
    %2 = arith.truncf %1 : vector<8x32xf32> to vector<8x32xbf16>
    %c0_2 = arith.constant 0 : index
    %c0_3 = arith.constant 0 : index
    %3 = vector.load %arg2[%c0_2, %c0_3] : memref<32x96xbf16, #tpu.memory_space<vmem>>, vector<32x96xbf16>
    %cst = arith.constant dense<0.000000e+00> : vector<8x96xf32>
    %4 = tpu.matmul %2, %3, %cst {dimension_numbers = #tpu.dot_dimension_numbers<[1], [0], [0], [1], [0, 0, 1, 1], [], []>} : vector<8x32xbf16>, vector<32x96xbf16>, vector<8x96xf32> -> vector<8x96xf32>
    %c0_4 = arith.constant 0 : index
    %c0_5 = arith.constant 0 : index
    %5 = vector.load %arg3[%c0_4, %c0_5] : memref<1x96xf32, #tpu.memory_space<vmem>>, vector<1x96xf32>
    %6 = vector.broadcast %5 : vector<1x96xf32> to vector<8x96xf32>
    %7 = arith.addf %4, %6 : vector<8x96xf32>
    %8 = vector.extract_strided_slice %7 {offsets = [0, 0], sizes = [2, 24], strides = [1, 1]} : vector<8x96xf32> to vector<2x24xf32>
    %c0_6 = arith.constant 0 : index
    %c0_7 = arith.constant 0 : index
    %9 = vector.load %arg15[%c0_6, %c0_7] : memref<8x24xf32, #tpu.memory_space<vmem>>, vector<2x24xf32>
    tpu.vector_store %arg15[%c0_6, %c0_7], %8 {strides = array<i32>} : memref<8x24xf32, #tpu.memory_space<vmem>>, vector<2x24xf32>,
    %10 = vector.extract_strided_slice %7 {offsets = [0, 24], sizes = [2, 24], strides = [1, 1]} : vector<8x96xf32> to vector<2x24xf32>
    %c2 = arith.constant 2 : index
    %c0_8 = arith.constant 0 : index
    %11 = vector.load %arg15[%c2, %c0_8] : memref<8x24xf32, #tpu.memory_space<vmem>>, vector<2x24xf32>
    tpu.vector_store %arg15[%c2, %c0_8], %10 {strides = array<i32>} : memref<8x24xf32, #tpu.memory_space<vmem>>, vector<2x24xf32>,
    %12 = vector.extract_strided_slice %7 {offsets = [0, 48], sizes = [2, 24], strides = [1, 1]} : vector<8x96xf32> to vector<2x24xf32>
    %c4 = arith.constant 4 : index
    %c0_9 = arith.constant 0 : index
    %13 = vector.load %arg15[%c4, %c0_9] : memref<8x24xf32, #tpu.memory_space<vmem>>, vector<2x24xf32>
    tpu.vector_store %arg15[%c4, %c0_9], %12 {strides = array<i32>} : memref<8x24xf32, #tpu.memory_space<vmem>>, vector<2x24xf32>,
    %14 = vector.extract_strided_slice %7 {offsets = [0, 72], sizes = [2, 24], strides = [1, 1]} : vector<8x96xf32> to vector<2x24xf32>
    %c6 = arith.constant 6 : index
    %c0_10 = arith.constant 0 : index
    %15 = vector.load %arg15[%c6, %c0_10] : memref<8x24xf32, #tpu.memory_space<vmem>>, vector<2x24xf32>
    tpu.vector_store %arg15[%c6, %c0_10], %14 {strides = array<i32>} : memref<8x24xf32, #tpu.memory_space<vmem>>, vector<2x24xf32>,
    %c0_11 = arith.constant 0 : index
    %c0_12 = arith.constant 0 : index
    %16 = vector.load %arg15[%c0_11, %c0_12] : memref<8x24xf32, #tpu.memory_space<vmem>>, vector<8x24xf32>
    %17 = vector.extract_strided_slice %16 {offsets = [0, 0], sizes = [8, 8], strides = [1, 1]} : vector<8x24xf32> to vector<8x8xf32>
    %18 = arith.truncf %17 : vector<8x8xf32> to vector<8x8xbf16>
    %19 = vector.extract_strided_slice %16 {offsets = [0, 8], sizes = [8, 8], strides = [1, 1]} : vector<8x24xf32> to vector<8x8xf32>
    %20 = arith.truncf %19 : vector<8x8xf32> to vector<8x8xbf16>
    %21 = vector.extract_strided_slice %16 {offsets = [0, 16], sizes = [8, 8], strides = [1, 1]} : vector<8x24xf32> to vector<8x8xf32>
    %22 = arith.truncf %21 : vector<8x8xf32> to vector<8x8xbf16>
    %cst_13 = arith.constant dense<0.000000e+00> : vector<8x8xf32>
    %23 = tpu.matmul %18, %20, %cst_13 {dimension_numbers = #tpu.dot_dimension_numbers<[1], [1], [0], [0], [0, 0, 1, 0], [], []>} : vector<8x8xbf16>, vector<8x8xbf16>, vector<8x8xf32> -> vector<8x8xf32>
    %cst_14 = arith.constant dense<0xFF800000> : vector<8xf32>
    %24 = vector.multi_reduction <maximumf>, %23, %cst_14 [1] : vector<8x8xf32> to vector<8xf32>
    %25 = vector.shape_cast %24 : vector<8xf32> to vector<8x1xf32>
    %26 = vector.broadcast %25 : vector<8x1xf32> to vector<8x8xf32>
    %27 = arith.subf %23, %26 : vector<8x8xf32>
    %28 = math.exp %27 : vector<8x8xf32>
    %cst_15 = arith.constant dense<0.000000e+00> : vector<8xf32>
    %29 = vector.multi_reduction <add>, %28, %cst_15 [1] : vector<8x8xf32> to vector<8xf32>
    %30 = vector.shape_cast %29 : vector<8xf32> to vector<8x1xf32>
    %31 = tpu.reciprocal %30 {approx = true} : vector<8x1xf32> -> vector<8x1xf32>
    %32 = vector.broadcast %31 : vector<8x1xf32> to vector<8x8xf32>
    %33 = arith.mulf %28, %32 : vector<8x8xf32>
    %34 = arith.truncf %33 : vector<8x8xf32> to vector<8x8xbf16>
    %cst_16 = arith.constant dense<0.000000e+00> : vector<8x8xf32>
    %35 = tpu.matmul %34, %22, %cst_16 {dimension_numbers = #tpu.dot_dimension_numbers<[1], [0], [0], [1], [0, 0, 1, 1], [], []>} : vector<8x8xbf16>, vector<8x8xbf16>, vector<8x8xf32> -> vector<8x8xf32>
    %36 = vector.extract_strided_slice %35 {offsets = [0, 0], sizes = [2, 8], strides = [1, 1]} : vector<8x8xf32> to vector<2x8xf32>
    %c0_17 = arith.constant 0 : index
    %c0_18 = arith.constant 0 : index
    %37 = vector.load %arg16[%c0_17, %c0_18] : memref<8x32xf32, #tpu.memory_space<vmem>>, vector<2x8xf32>
    tpu.vector_store %arg16[%c0_17, %c0_18], %36 {strides = array<i32>} : memref<8x32xf32, #tpu.memory_space<vmem>>, vector<2x8xf32>,
    %38 = vector.extract_strided_slice %35 {offsets = [2, 0], sizes = [2, 8], strides = [1, 1]} : vector<8x8xf32> to vector<2x8xf32>
    %c0_19 = arith.constant 0 : index
    %c8 = arith.constant 8 : index
    %39 = vector.load %arg16[%c0_19, %c8] : memref<8x32xf32, #tpu.memory_space<vmem>>, vector<2x8xf32>
    tpu.vector_store %arg16[%c0_19, %c8], %38 {strides = array<i32>} : memref<8x32xf32, #tpu.memory_space<vmem>>, vector<2x8xf32>,
    %40 = vector.extract_strided_slice %35 {offsets = [4, 0], sizes = [2, 8], strides = [1, 1]} : vector<8x8xf32> to vector<2x8xf32>
    %c0_20 = arith.constant 0 : index
    %c16 = arith.constant 16 : index
    %41 = vector.load %arg16[%c0_20, %c16] : memref<8x32xf32, #tpu.memory_space<vmem>>, vector<2x8xf32>
    tpu.vector_store %arg16[%c0_20, %c16], %40 {strides = array<i32>} : memref<8x32xf32, #tpu.memory_space<vmem>>, vector<2x8xf32>,
    %42 = vector.extract_strided_slice %35 {offsets = [6, 0], sizes = [2, 8], strides = [1, 1]} : vector<8x8xf32> to vector<2x8xf32>
    %c0_21 = arith.constant 0 : index
    %c24 = arith.constant 24 : index
    %43 = vector.load %arg16[%c0_21, %c24] : memref<8x32xf32, #tpu.memory_space<vmem>>, vector<2x8xf32>
    tpu.vector_store %arg16[%c0_21, %c24], %42 {strides = array<i32>} : memref<8x32xf32, #tpu.memory_space<vmem>>, vector<2x8xf32>,
    %44 = vector.extract_strided_slice %7 {offsets = [2, 0], sizes = [2, 24], strides = [1, 1]} : vector<8x96xf32> to vector<2x24xf32>
    %c0_22 = arith.constant 0 : index
    %c0_23 = arith.constant 0 : index
    %45 = vector.load %arg15[%c0_22, %c0_23] : memref<8x24xf32, #tpu.memory_space<vmem>>, vector<2x24xf32>
    tpu.vector_store %arg15[%c0_22, %c0_23], %44 {strides = array<i32>} : memref<8x24xf32, #tpu.memory_space<vmem>>, vector<2x24xf32>,
    %46 = vector.extract_strided_slice %7 {offsets = [2, 24], sizes = [2, 24], strides = [1, 1]} : vector<8x96xf32> to vector<2x24xf32>
    %c2_24 = arith.constant 2 : index
    %c0_25 = arith.constant 0 : index
    %47 = vector.load %arg15[%c2_24, %c0_25] : memref<8x24xf32, #tpu.memory_space<vmem>>, vector<2x24xf32>
    tpu.vector_store %arg15[%c2_24, %c0_25], %46 {strides = array<i32>} : memref<8x24xf32, #tpu.memory_space<vmem>>, vector<2x24xf32>,
    %48 = vector.extract_strided_slice %7 {offsets = [2, 48], sizes = [2, 24], strides = [1, 1]} : vector<8x96xf32> to vector<2x24xf32>
    %c4_26 = arith.constant 4 : index
    %c0_27 = arith.constant 0 : index
    %49 = vector.load %arg15[%c4_26, %c0_27] : memref<8x24xf32, #tpu.memory_space<vmem>>, vector<2x24xf32>
    tpu.vector_store %arg15[%c4_26, %c0_27], %48 {strides = array<i32>} : memref<8x24xf32, #tpu.memory_space<vmem>>, vector<2x24xf32>,
    %50 = vector.extract_strided_slice %7 {offsets = [2, 72], sizes = [2, 24], strides = [1, 1]} : vector<8x96xf32> to vector<2x24xf32>
    %c6_28 = arith.constant 6 : index
    %c0_29 = arith.constant 0 : index
    %51 = vector.load %arg15[%c6_28, %c0_29] : memref<8x24xf32, #tpu.memory_space<vmem>>, vector<2x24xf32>
    tpu.vector_store %arg15[%c6_28, %c0_29], %50 {strides = array<i32>} : memref<8x24xf32, #tpu.memory_space<vmem>>, vector<2x24xf32>,
    %c0_30 = arith.constant 0 : index
    %c0_31 = arith.constant 0 : index
    %52 = vector.load %arg15[%c0_30, %c0_31] : memref<8x24xf32, #tpu.memory_space<vmem>>, vector<8x24xf32>
    %53 = vector.extract_strided_slice %52 {offsets = [0, 0], sizes = [8, 8], strides = [1, 1]} : vector<8x24xf32> to vector<8x8xf32>
    %54 = arith.truncf %53 : vector<8x8xf32> to vector<8x8xbf16>
    %55 = vector.extract_strided_slice %52 {offsets = [0, 8], sizes = [8, 8], strides = [1, 1]} : vector<8x24xf32> to vector<8x8xf32>
    %56 = arith.truncf %55 : vector<8x8xf32> to vector<8x8xbf16>
    %57 = vector.extract_strided_slice %52 {offsets = [0, 16], sizes = [8, 8], strides = [1, 1]} : vector<8x24xf32> to vector<8x8xf32>
    %58 = arith.truncf %57 : vector<8x8xf32> to vector<8x8xbf16>
    %cst_32 = arith.constant dense<0.000000e+00> : vector<8x8xf32>
    %59 = tpu.matmul %54, %56, %cst_32 {dimension_numbers = #tpu.dot_dimension_numbers<[1], [1], [0], [0], [0, 0, 1, 0], [], []>} : vector<8x8xbf16>, vector<8x8xbf16>, vector<8x8xf32> -> vector<8x8xf32>
    %cst_33 = arith.constant dense<0xFF800000> : vector<8xf32>
    %60 = vector.multi_reduction <maximumf>, %59, %cst_33 [1] : vector<8x8xf32> to vector<8xf32>
    %61 = vector.shape_cast %60 : vector<8xf32> to vector<8x1xf32>
    %62 = vector.broadcast %61 : vector<8x1xf32> to vector<8x8xf32>
    %63 = arith.subf %59, %62 : vector<8x8xf32>
    %64 = math.exp %63 : vector<8x8xf32>
    %cst_34 = arith.constant dense<0.000000e+00> : vector<8xf32>
    %65 = vector.multi_reduction <add>, %64, %cst_34 [1] : vector<8x8xf32> to vector<8xf32>
    %66 = vector.shape_cast %65 : vector<8xf32> to vector<8x1xf32>
    %67 = tpu.reciprocal %66 {approx = true} : vector<8x1xf32> -> vector<8x1xf32>
    %68 = vector.broadcast %67 : vector<8x1xf32> to vector<8x8xf32>
    %69 = arith.mulf %64, %68 : vector<8x8xf32>
    %70 = arith.truncf %69 : vector<8x8xf32> to vector<8x8xbf16>
    %cst_35 = arith.constant dense<0.000000e+00> : vector<8x8xf32>
    %71 = tpu.matmul %70, %58, %cst_35 {dimension_numbers = #tpu.dot_dimension_numbers<[1], [0], [0], [1], [0, 0, 1, 1], [], []>} : vector<8x8xbf16>, vector<8x8xbf16>, vector<8x8xf32> -> vector<8x8xf32>
    %72 = vector.extract_strided_slice %71 {offsets = [0, 0], sizes = [2, 8], strides = [1, 1]} : vector<8x8xf32> to vector<2x8xf32>
    %c2_36 = arith.constant 2 : index
    %c0_37 = arith.constant 0 : index
    %73 = vector.load %arg16[%c2_36, %c0_37] : memref<8x32xf32, #tpu.memory_space<vmem>>, vector<2x8xf32>
    tpu.vector_store %arg16[%c2_36, %c0_37], %72 {strides = array<i32>} : memref<8x32xf32, #tpu.memory_space<vmem>>, vector<2x8xf32>,
    %74 = vector.extract_strided_slice %71 {offsets = [2, 0], sizes = [2, 8], strides = [1, 1]} : vector<8x8xf32> to vector<2x8xf32>
    %c2_38 = arith.constant 2 : index
    %c8_39 = arith.constant 8 : index
    %75 = vector.load %arg16[%c2_38, %c8_39] : memref<8x32xf32, #tpu.memory_space<vmem>>, vector<2x8xf32>
    tpu.vector_store %arg16[%c2_38, %c8_39], %74 {strides = array<i32>} : memref<8x32xf32, #tpu.memory_space<vmem>>, vector<2x8xf32>,
    %76 = vector.extract_strided_slice %71 {offsets = [4, 0], sizes = [2, 8], strides = [1, 1]} : vector<8x8xf32> to vector<2x8xf32>
    %c2_40 = arith.constant 2 : index
    %c16_41 = arith.constant 16 : index
    %77 = vector.load %arg16[%c2_40, %c16_41] : memref<8x32xf32, #tpu.memory_space<vmem>>, vector<2x8xf32>
    tpu.vector_store %arg16[%c2_40, %c16_41], %76 {strides = array<i32>} : memref<8x32xf32, #tpu.memory_space<vmem>>, vector<2x8xf32>,
    %78 = vector.extract_strided_slice %71 {offsets = [6, 0], sizes = [2, 8], strides = [1, 1]} : vector<8x8xf32> to vector<2x8xf32>
    %c2_42 = arith.constant 2 : index
    %c24_43 = arith.constant 24 : index
    %79 = vector.load %arg16[%c2_42, %c24_43] : memref<8x32xf32, #tpu.memory_space<vmem>>, vector<2x8xf32>
    tpu.vector_store %arg16[%c2_42, %c24_43], %78 {strides = array<i32>} : memref<8x32xf32, #tpu.memory_space<vmem>>, vector<2x8xf32>,
    %80 = vector.extract_strided_slice %7 {offsets = [4, 0], sizes = [2, 24], strides = [1, 1]} : vector<8x96xf32> to vector<2x24xf32>
    %c0_44 = arith.constant 0 : index
    %c0_45 = arith.constant 0 : index
    %81 = vector.load %arg15[%c0_44, %c0_45] : memref<8x24xf32, #tpu.memory_space<vmem>>, vector<2x24xf32>
    tpu.vector_store %arg15[%c0_44, %c0_45], %80 {strides = array<i32>} : memref<8x24xf32, #tpu.memory_space<vmem>>, vector<2x24xf32>,
    %82 = vector.extract_strided_slice %7 {offsets = [4, 24], sizes = [2, 24], strides = [1, 1]} : vector<8x96xf32> to vector<2x24xf32>
    %c2_46 = arith.constant 2 : index
    %c0_47 = arith.constant 0 : index
    %83 = vector.load %arg15[%c2_46, %c0_47] : memref<8x24xf32, #tpu.memory_space<vmem>>, vector<2x24xf32>
    tpu.vector_store %arg15[%c2_46, %c0_47], %82 {strides = array<i32>} : memref<8x24xf32, #tpu.memory_space<vmem>>, vector<2x24xf32>,
    %84 = vector.extract_strided_slice %7 {offsets = [4, 48], sizes = [2, 24], strides = [1, 1]} : vector<8x96xf32> to vector<2x24xf32>
    %c4_48 = arith.constant 4 : index
    %c0_49 = arith.constant 0 : index
    %85 = vector.load %arg15[%c4_48, %c0_49] : memref<8x24xf32, #tpu.memory_space<vmem>>, vector<2x24xf32>
    tpu.vector_store %arg15[%c4_48, %c0_49], %84 {strides = array<i32>} : memref<8x24xf32, #tpu.memory_space<vmem>>, vector<2x24xf32>,
    %86 = vector.extract_strided_slice %7 {offsets = [4, 72], sizes = [2, 24], strides = [1, 1]} : vector<8x96xf32> to vector<2x24xf32>
    %c6_50 = arith.constant 6 : index
    %c0_51 = arith.constant 0 : index
    %87 = vector.load %arg15[%c6_50, %c0_51] : memref<8x24xf32, #tpu.memory_space<vmem>>, vector<2x24xf32>
    tpu.vector_store %arg15[%c6_50, %c0_51], %86 {strides = array<i32>} : memref<8x24xf32, #tpu.memory_space<vmem>>, vector<2x24xf32>,
    %c0_52 = arith.constant 0 : index
    %c0_53 = arith.constant 0 : index
    %88 = vector.load %arg15[%c0_52, %c0_53] : memref<8x24xf32, #tpu.memory_space<vmem>>, vector<8x24xf32>
    %89 = vector.extract_strided_slice %88 {offsets = [0, 0], sizes = [8, 8], strides = [1, 1]} : vector<8x24xf32> to vector<8x8xf32>
    %90 = arith.truncf %89 : vector<8x8xf32> to vector<8x8xbf16>
    %91 = vector.extract_strided_slice %88 {offsets = [0, 8], sizes = [8, 8], strides = [1, 1]} : vector<8x24xf32> to vector<8x8xf32>
    %92 = arith.truncf %91 : vector<8x8xf32> to vector<8x8xbf16>
    %93 = vector.extract_strided_slice %88 {offsets = [0, 16], sizes = [8, 8], strides = [1, 1]} : vector<8x24xf32> to vector<8x8xf32>
    %94 = arith.truncf %93 : vector<8x8xf32> to vector<8x8xbf16>
    %cst_54 = arith.constant dense<0.000000e+00> : vector<8x8xf32>
    %95 = tpu.matmul %90, %92, %cst_54 {dimension_numbers = #tpu.dot_dimension_numbers<[1], [1], [0], [0], [0, 0, 1, 0], [], []>} : vector<8x8xbf16>, vector<8x8xbf16>, vector<8x8xf32> -> vector<8x8xf32>
    %cst_55 = arith.constant dense<0xFF800000> : vector<8xf32>
    %96 = vector.multi_reduction <maximumf>, %95, %cst_55 [1] : vector<8x8xf32> to vector<8xf32>
    %97 = vector.shape_cast %96 : vector<8xf32> to vector<8x1xf32>
    %98 = vector.broadcast %97 : vector<8x1xf32> to vector<8x8xf32>
    %99 = arith.subf %95, %98 : vector<8x8xf32>
    %100 = math.exp %99 : vector<8x8xf32>
    %cst_56 = arith.constant dense<0.000000e+00> : vector<8xf32>
    %101 = vector.multi_reduction <add>, %100, %cst_56 [1] : vector<8x8xf32> to vector<8xf32>
    %102 = vector.shape_cast %101 : vector<8xf32> to vector<8x1xf32>
    %103 = tpu.reciprocal %102 {approx = true} : vector<8x1xf32> -> vector<8x1xf32>
    %104 = vector.broadcast %103 : vector<8x1xf32> to vector<8x8xf32>
    %105 = arith.mulf %100, %104 : vector<8x8xf32>
    %106 = arith.truncf %105 : vector<8x8xf32> to vector<8x8xbf16>
    %cst_57 = arith.constant dense<0.000000e+00> : vector<8x8xf32>
    %107 = tpu.matmul %106, %94, %cst_57 {dimension_numbers = #tpu.dot_dimension_numbers<[1], [0], [0], [1], [0, 0, 1, 1], [], []>} : vector<8x8xbf16>, vector<8x8xbf16>, vector<8x8xf32> -> vector<8x8xf32>
    %108 = vector.extract_strided_slice %107 {offsets = [0, 0], sizes = [2, 8], strides = [1, 1]} : vector<8x8xf32> to vector<2x8xf32>
    %c4_58 = arith.constant 4 : index
    %c0_59 = arith.constant 0 : index
    %109 = vector.load %arg16[%c4_58, %c0_59] : memref<8x32xf32, #tpu.memory_space<vmem>>, vector<2x8xf32>
    tpu.vector_store %arg16[%c4_58, %c0_59], %108 {strides = array<i32>} : memref<8x32xf32, #tpu.memory_space<vmem>>, vector<2x8xf32>,
    %110 = vector.extract_strided_slice %107 {offsets = [2, 0], sizes = [2, 8], strides = [1, 1]} : vector<8x8xf32> to vector<2x8xf32>
    %c4_60 = arith.constant 4 : index
    %c8_61 = arith.constant 8 : index
    %111 = vector.load %arg16[%c4_60, %c8_61] : memref<8x32xf32, #tpu.memory_space<vmem>>, vector<2x8xf32>
    tpu.vector_store %arg16[%c4_60, %c8_61], %110 {strides = array<i32>} : memref<8x32xf32, #tpu.memory_space<vmem>>, vector<2x8xf32>,
    %112 = vector.extract_strided_slice %107 {offsets = [4, 0], sizes = [2, 8], strides = [1, 1]} : vector<8x8xf32> to vector<2x8xf32>
    %c4_62 = arith.constant 4 : index
    %c16_63 = arith.constant 16 : index
    %113 = vector.load %arg16[%c4_62, %c16_63] : memref<8x32xf32, #tpu.memory_space<vmem>>, vector<2x8xf32>
    tpu.vector_store %arg16[%c4_62, %c16_63], %112 {strides = array<i32>} : memref<8x32xf32, #tpu.memory_space<vmem>>, vector<2x8xf32>,
    %114 = vector.extract_strided_slice %107 {offsets = [6, 0], sizes = [2, 8], strides = [1, 1]} : vector<8x8xf32> to vector<2x8xf32>
    %c4_64 = arith.constant 4 : index
    %c24_65 = arith.constant 24 : index
    %115 = vector.load %arg16[%c4_64, %c24_65] : memref<8x32xf32, #tpu.memory_space<vmem>>, vector<2x8xf32>
    tpu.vector_store %arg16[%c4_64, %c24_65], %114 {strides = array<i32>} : memref<8x32xf32, #tpu.memory_space<vmem>>, vector<2x8xf32>,
    %116 = vector.extract_strided_slice %7 {offsets = [6, 0], sizes = [2, 24], strides = [1, 1]} : vector<8x96xf32> to vector<2x24xf32>
    %c0_66 = arith.constant 0 : index
    %c0_67 = arith.constant 0 : index
    %117 = vector.load %arg15[%c0_66, %c0_67] : memref<8x24xf32, #tpu.memory_space<vmem>>, vector<2x24xf32>
    tpu.vector_store %arg15[%c0_66, %c0_67], %116 {strides = array<i32>} : memref<8x24xf32, #tpu.memory_space<vmem>>, vector<2x24xf32>,
    %118 = vector.extract_strided_slice %7 {offsets = [6, 24], sizes = [2, 24], strides = [1, 1]} : vector<8x96xf32> to vector<2x24xf32>
    %c2_68 = arith.constant 2 : index
    %c0_69 = arith.constant 0 : index
    %119 = vector.load %arg15[%c2_68, %c0_69] : memref<8x24xf32, #tpu.memory_space<vmem>>, vector<2x24xf32>
    tpu.vector_store %arg15[%c2_68, %c0_69], %118 {strides = array<i32>} : memref<8x24xf32, #tpu.memory_space<vmem>>, vector<2x24xf32>,
    %120 = vector.extract_strided_slice %7 {offsets = [6, 48], sizes = [2, 24], strides = [1, 1]} : vector<8x96xf32> to vector<2x24xf32>
    %c4_70 = arith.constant 4 : index
    %c0_71 = arith.constant 0 : index
    %121 = vector.load %arg15[%c4_70, %c0_71] : memref<8x24xf32, #tpu.memory_space<vmem>>, vector<2x24xf32>
    tpu.vector_store %arg15[%c4_70, %c0_71], %120 {strides = array<i32>} : memref<8x24xf32, #tpu.memory_space<vmem>>, vector<2x24xf32>,
    %122 = vector.extract_strided_slice %7 {offsets = [6, 72], sizes = [2, 24], strides = [1, 1]} : vector<8x96xf32> to vector<2x24xf32>
    %c6_72 = arith.constant 6 : index
    %c0_73 = arith.constant 0 : index
    %123 = vector.load %arg15[%c6_72, %c0_73] : memref<8x24xf32, #tpu.memory_space<vmem>>, vector<2x24xf32>
    tpu.vector_store %arg15[%c6_72, %c0_73], %122 {strides = array<i32>} : memref<8x24xf32, #tpu.memory_space<vmem>>, vector<2x24xf32>,
    %c0_74 = arith.constant 0 : index
    %c0_75 = arith.constant 0 : index
    %124 = vector.load %arg15[%c0_74, %c0_75] : memref<8x24xf32, #tpu.memory_space<vmem>>, vector<8x24xf32>
    %125 = vector.extract_strided_slice %124 {offsets = [0, 0], sizes = [8, 8], strides = [1, 1]} : vector<8x24xf32> to vector<8x8xf32>
    %126 = arith.truncf %125 : vector<8x8xf32> to vector<8x8xbf16>
    %127 = vector.extract_strided_slice %124 {offsets = [0, 8], sizes = [8, 8], strides = [1, 1]} : vector<8x24xf32> to vector<8x8xf32>
    %128 = arith.truncf %127 : vector<8x8xf32> to vector<8x8xbf16>
    %129 = vector.extract_strided_slice %124 {offsets = [0, 16], sizes = [8, 8], strides = [1, 1]} : vector<8x24xf32> to vector<8x8xf32>
    %130 = arith.truncf %129 : vector<8x8xf32> to vector<8x8xbf16>
    %cst_76 = arith.constant dense<0.000000e+00> : vector<8x8xf32>
    %131 = tpu.matmul %126, %128, %cst_76 {dimension_numbers = #tpu.dot_dimension_numbers<[1], [1], [0], [0], [0, 0, 1, 0], [], []>} : vector<8x8xbf16>, vector<8x8xbf16>, vector<8x8xf32> -> vector<8x8xf32>
    %cst_77 = arith.constant dense<0xFF800000> : vector<8xf32>
    %132 = vector.multi_reduction <maximumf>, %131, %cst_77 [1] : vector<8x8xf32> to vector<8xf32>
    %133 = vector.shape_cast %132 : vector<8xf32> to vector<8x1xf32>
    %134 = vector.broadcast %133 : vector<8x1xf32> to vector<8x8xf32>
    %135 = arith.subf %131, %134 : vector<8x8xf32>
    %136 = math.exp %135 : vector<8x8xf32>
    %cst_78 = arith.constant dense<0.000000e+00> : vector<8xf32>
    %137 = vector.multi_reduction <add>, %136, %cst_78 [1] : vector<8x8xf32> to vector<8xf32>
    %138 = vector.shape_cast %137 : vector<8xf32> to vector<8x1xf32>
    %139 = tpu.reciprocal %138 {approx = true} : vector<8x1xf32> -> vector<8x1xf32>
    %140 = vector.broadcast %139 : vector<8x1xf32> to vector<8x8xf32>
    %141 = arith.mulf %136, %140 : vector<8x8xf32>
    %142 = arith.truncf %141 : vector<8x8xf32> to vector<8x8xbf16>
    %cst_79 = arith.constant dense<0.000000e+00> : vector<8x8xf32>
    %143 = tpu.matmul %142, %130, %cst_79 {dimension_numbers = #tpu.dot_dimension_numbers<[1], [0], [0], [1], [0, 0, 1, 1], [], []>} : vector<8x8xbf16>, vector<8x8xbf16>, vector<8x8xf32> -> vector<8x8xf32>
    %144 = vector.extract_strided_slice %143 {offsets = [0, 0], sizes = [2, 8], strides = [1, 1]} : vector<8x8xf32> to vector<2x8xf32>
    %c6_80 = arith.constant 6 : index
    %c0_81 = arith.constant 0 : index
    %145 = vector.load %arg16[%c6_80, %c0_81] : memref<8x32xf32, #tpu.memory_space<vmem>>, vector<2x8xf32>
    tpu.vector_store %arg16[%c6_80, %c0_81], %144 {strides = array<i32>} : memref<8x32xf32, #tpu.memory_space<vmem>>, vector<2x8xf32>,
    %146 = vector.extract_strided_slice %143 {offsets = [2, 0], sizes = [2, 8], strides = [1, 1]} : vector<8x8xf32> to vector<2x8xf32>
    %c6_82 = arith.constant 6 : index
    %c8_83 = arith.constant 8 : index
    %147 = vector.load %arg16[%c6_82, %c8_83] : memref<8x32xf32, #tpu.memory_space<vmem>>, vector<2x8xf32>
    tpu.vector_store %arg16[%c6_82, %c8_83], %146 {strides = array<i32>} : memref<8x32xf32, #tpu.memory_space<vmem>>, vector<2x8xf32>,
    %148 = vector.extract_strided_slice %143 {offsets = [4, 0], sizes = [2, 8], strides = [1, 1]} : vector<8x8xf32> to vector<2x8xf32>
    %c6_84 = arith.constant 6 : index
    %c16_85 = arith.constant 16 : index
    %149 = vector.load %arg16[%c6_84, %c16_85] : memref<8x32xf32, #tpu.memory_space<vmem>>, vector<2x8xf32>
    tpu.vector_store %arg16[%c6_84, %c16_85], %148 {strides = array<i32>} : memref<8x32xf32, #tpu.memory_space<vmem>>, vector<2x8xf32>,
    %150 = vector.extract_strided_slice %143 {offsets = [6, 0], sizes = [2, 8], strides = [1, 1]} : vector<8x8xf32> to vector<2x8xf32>
    %c6_86 = arith.constant 6 : index
    %c24_87 = arith.constant 24 : index
    %151 = vector.load %arg16[%c6_86, %c24_87] : memref<8x32xf32, #tpu.memory_space<vmem>>, vector<2x8xf32>
    tpu.vector_store %arg16[%c6_86, %c24_87], %150 {strides = array<i32>} : memref<8x32xf32, #tpu.memory_space<vmem>>, vector<2x8xf32>,
    %c0_88 = arith.constant 0 : index
    %c0_89 = arith.constant 0 : index
    %152 = vector.load %arg16[%c0_88, %c0_89] : memref<8x32xf32, #tpu.memory_space<vmem>>, vector<8x32xf32>
    %153 = arith.truncf %152 : vector<8x32xf32> to vector<8x32xbf16>
    %c0_90 = arith.constant 0 : index
    %c0_91 = arith.constant 0 : index
    %154 = vector.load %arg4[%c0_90, %c0_91] : memref<32x32xbf16, #tpu.memory_space<vmem>>, vector<32x32xbf16>
    %cst_92 = arith.constant dense<0.000000e+00> : vector<8x32xf32>
    %155 = tpu.matmul %153, %154, %cst_92 {dimension_numbers = #tpu.dot_dimension_numbers<[1], [0], [0], [1], [0, 0, 1, 1], [], []>} : vector<8x32xbf16>, vector<32x32xbf16>, vector<8x32xf32> -> vector<8x32xf32>
    %c0_93 = arith.constant 0 : index
    %c0_94 = arith.constant 0 : index
    %156 = vector.load %arg5[%c0_93, %c0_94] : memref<1x32xf32, #tpu.memory_space<vmem>>, vector<1x32xf32>
    %157 = vector.broadcast %156 : vector<1x32xf32> to vector<8x32xf32>
    %158 = arith.addf %155, %157 : vector<8x32xf32>
    %c0_95 = arith.constant 0 : index
    %c0_96 = arith.constant 0 : index
    %159 = vector.load %arg6[%c0_95, %c0_96] : memref<1x32xf32, #tpu.memory_space<vmem>>, vector<1x32xf32>
    %c0_97 = arith.constant 0 : index
    %c0_98 = arith.constant 0 : index
    %160 = vector.load %arg7[%c0_97, %c0_98] : memref<1x32xf32, #tpu.memory_space<vmem>>, vector<1x32xf32>
    %161 = arith.addf %1, %158 : vector<8x32xf32>
    %cst_99 = arith.constant dense<0.000000e+00> : vector<8xf32>
    %162 = vector.multi_reduction <add>, %161, %cst_99 [1] : vector<8x32xf32> to vector<8xf32>
    %163 = vector.shape_cast %162 : vector<8xf32> to vector<8x1xf32>
    %cst_100 = arith.constant 3.200000e+01 : f32
    %164 = vector.broadcast %cst_100 : f32 to vector<8x1xf32>
    %165 = arith.divf %163, %164 : vector<8x1xf32>
    %166 = vector.broadcast %165 : vector<8x1xf32> to vector<8x32xf32>
    %167 = arith.subf %161, %166 : vector<8x32xf32>
    %168 = arith.mulf %167, %167 : vector<8x32xf32>
    %cst_101 = arith.constant dense<0.000000e+00> : vector<8xf32>
    %169 = vector.multi_reduction <add>, %168, %cst_101 [1] : vector<8x32xf32> to vector<8xf32>
    %170 = vector.shape_cast %169 : vector<8xf32> to vector<8x1xf32>
    %cst_102 = arith.constant 3.200000e+01 : f32
    %171 = vector.broadcast %cst_102 : f32 to vector<8x1xf32>
    %172 = arith.divf %170, %171 : vector<8x1xf32>
    %cst_103 = arith.constant 9.99999974E-6 : f32
    %173 = vector.broadcast %cst_103 : f32 to vector<8x1xf32>
    %174 = arith.addf %172, %173 : vector<8x1xf32>
    %175 = math.rsqrt %174 : vector<8x1xf32>
    %176 = vector.broadcast %175 : vector<8x1xf32> to vector<8x32xf32>
    %177 = arith.mulf %167, %176 : vector<8x32xf32>
    %178 = vector.broadcast %159 : vector<1x32xf32> to vector<8x32xf32>
    %179 = arith.mulf %177, %178 : vector<8x32xf32>
    %180 = vector.broadcast %160 : vector<1x32xf32> to vector<8x32xf32>
    %181 = arith.addf %179, %180 : vector<8x32xf32>
    %182 = arith.truncf %181 : vector<8x32xf32> to vector<8x32xbf16>
    %c0_104 = arith.constant 0 : index
    %c0_105 = arith.constant 0 : index
    %183 = vector.load %arg8[%c0_104, %c0_105] : memref<32x128xbf16, #tpu.memory_space<vmem>>, vector<32x128xbf16>
    %cst_106 = arith.constant dense<0.000000e+00> : vector<8x128xf32>
    %184 = tpu.matmul %182, %183, %cst_106 {dimension_numbers = #tpu.dot_dimension_numbers<[1], [0], [0], [1], [0, 0, 1, 1], [], []>} : vector<8x32xbf16>, vector<32x128xbf16>, vector<8x128xf32> -> vector<8x128xf32>
    %c0_107 = arith.constant 0 : index
    %c0_108 = arith.constant 0 : index
    %185 = vector.load %arg9[%c0_107, %c0_108] : memref<1x128xf32, #tpu.memory_space<vmem>>, vector<1x128xf32>
    %186 = vector.broadcast %185 : vector<1x128xf32> to vector<8x128xf32>
    %187 = arith.addf %184, %186 : vector<8x128xf32>
    %cst_109 = arith.constant 5.000000e-01 : f32
    %188 = vector.broadcast %cst_109 : f32 to vector<8x128xf32>
    %189 = arith.mulf %188, %187 : vector<8x128xf32>
    %cst_110 = arith.constant 0.707106769 : f32
    %190 = vector.broadcast %cst_110 : f32 to vector<8x128xf32>
    %191 = arith.mulf %187, %190 : vector<8x128xf32>
    %192 = math.absf %191 : vector<8x128xf32>
    %cst_111 = arith.constant 0.327591091 : f32
    %193 = vector.broadcast %cst_111 : f32 to vector<8x128xf32>
    %194 = arith.mulf %193, %192 : vector<8x128xf32>
    %cst_112 = arith.constant 1.000000e+00 : f32
    %195 = vector.broadcast %cst_112 : f32 to vector<8x128xf32>
    %196 = arith.addf %195, %194 : vector<8x128xf32>
    %197 = tpu.reciprocal %196 {approx = true} : vector<8x128xf32> -> vector<8x128xf32>
    %cst_113 = arith.constant 1.06140542 : f32
    %198 = vector.broadcast %cst_113 : f32 to vector<8x128xf32>
    %199 = arith.mulf %197, %198 : vector<8x128xf32>
    %cst_114 = arith.constant -1.45315206 : f32
    %200 = vector.broadcast %cst_114 : f32 to vector<8x128xf32>
    %201 = arith.addf %200, %199 : vector<8x128xf32>
    %202 = arith.mulf %197, %201 : vector<8x128xf32>
    %cst_115 = arith.constant 1.42141378 : f32
    %203 = vector.broadcast %cst_115 : f32 to vector<8x128xf32>
    %204 = arith.addf %203, %202 : vector<8x128xf32>
    %205 = arith.mulf %197, %204 : vector<8x128xf32>
    %cst_116 = arith.constant -0.284496725 : f32
    %206 = vector.broadcast %cst_116 : f32 to vector<8x128xf32>
    %207 = arith.addf %206, %205 : vector<8x128xf32>
    %208 = arith.mulf %197, %207 : vector<8x128xf32>
    %cst_117 = arith.constant 0.254829586 : f32
    %209 = vector.broadcast %cst_117 : f32 to vector<8x128xf32>
    %210 = arith.addf %209, %208 : vector<8x128xf32>
    %211 = arith.mulf %197, %210 : vector<8x128xf32>
    %cst_118 = arith.constant 0.000000e+00 : f32
    %212 = vector.broadcast %cst_118 : f32 to vector<8x128xf32>
    %213 = arith.subf %212, %192 : vector<8x128xf32>
    %214 = arith.mulf %213, %192 : vector<8x128xf32>
    %215 = math.exp %214 : vector<8x128xf32>
    %216 = arith.mulf %211, %215 : vector<8x128xf32>
    %cst_119 = arith.constant 1.000000e+00 : f32
    %217 = vector.broadcast %cst_119 : f32 to vector<8x128xf32>
    %218 = arith.subf %217, %216 : vector<8x128xf32>
    %cst_120 = arith.constant 0.000000e+00 : f32
    %219 = vector.broadcast %cst_120 : f32 to vector<8x128xf32>
    %220 = arith.cmpf oge, %191, %219 : vector<8x128xf32>
    %cst_121 = arith.constant 0.000000e+00 : f32
    %221 = vector.broadcast %cst_121 : f32 to vector<8x128xf32>
    %222 = arith.subf %221, %218 : vector<8x128xf32>
    %223 = arith.select %220, %218, %222 : vector<8x128xi1>, vector<8x128xf32>
    %cst_122 = arith.constant 1.000000e+00 : f32
    %224 = vector.broadcast %cst_122 : f32 to vector<8x128xf32>
    %225 = arith.addf %224, %223 : vector<8x128xf32>
    %226 = arith.mulf %189, %225 : vector<8x128xf32>
    %227 = arith.truncf %226 : vector<8x128xf32> to vector<8x128xbf16>
    %c0_123 = arith.constant 0 : index
    %c0_124 = arith.constant 0 : index
    %228 = vector.load %arg10[%c0_123, %c0_124] : memref<128x32xbf16, #tpu.memory_space<vmem>>, vector<128x32xbf16>
    %cst_125 = arith.constant dense<0.000000e+00> : vector<8x32xf32>
    %229 = tpu.matmul %227, %228, %cst_125 {dimension_numbers = #tpu.dot_dimension_numbers<[1], [0], [0], [1], [0, 0, 1, 1], [], []>} : vector<8x128xbf16>, vector<128x32xbf16>, vector<8x32xf32> -> vector<8x32xf32>
    %c0_126 = arith.constant 0 : index
    %c0_127 = arith.constant 0 : index
    %230 = vector.load %arg11[%c0_126, %c0_127] : memref<1x32xf32, #tpu.memory_space<vmem>>, vector<1x32xf32>
    %231 = vector.broadcast %230 : vector<1x32xf32> to vector<8x32xf32>
    %232 = arith.addf %229, %231 : vector<8x32xf32>
    %233 = arith.addf %181, %232 : vector<8x32xf32>
    %cst_128 = arith.constant dense<0.000000e+00> : vector<8xf32>
    %234 = vector.multi_reduction <add>, %233, %cst_128 [1] : vector<8x32xf32> to vector<8xf32>
    %235 = vector.shape_cast %234 : vector<8xf32> to vector<8x1xf32>
    %cst_129 = arith.constant 3.200000e+01 : f32
    %236 = vector.broadcast %cst_129 : f32 to vector<8x1xf32>
    %237 = arith.divf %235, %236 : vector<8x1xf32>
    %238 = vector.broadcast %237 : vector<8x1xf32> to vector<8x32xf32>
    %239 = arith.subf %233, %238 : vector<8x32xf32>
    %240 = arith.mulf %239, %239 : vector<8x32xf32>
    %cst_130 = arith.constant dense<0.000000e+00> : vector<8xf32>
    %241 = vector.multi_reduction <add>, %240, %cst_130 [1] : vector<8x32xf32> to vector<8xf32>
    %242 = vector.shape_cast %241 : vector<8xf32> to vector<8x1xf32>
    %cst_131 = arith.constant 3.200000e+01 : f32
    %243 = vector.broadcast %cst_131 : f32 to vector<8x1xf32>
    %244 = arith.divf %242, %243 : vector<8x1xf32>
    %cst_132 = arith.constant 9.99999974E-6 : f32
    %245 = vector.broadcast %cst_132 : f32 to vector<8x1xf32>
    %246 = arith.addf %244, %245 : vector<8x1xf32>
    %247 = math.rsqrt %246 : vector<8x1xf32>
    %248 = vector.broadcast %247 : vector<8x1xf32> to vector<8x32xf32>
    %249 = arith.mulf %239, %248 : vector<8x32xf32>
    %250 = vector.broadcast %159 : vector<1x32xf32> to vector<8x32xf32>
    %251 = arith.mulf %249, %250 : vector<8x32xf32>
    %252 = vector.broadcast %160 : vector<1x32xf32> to vector<8x32xf32>
    %253 = arith.addf %251, %252 : vector<8x32xf32>
    %254 = arith.truncf %253 : vector<8x32xf32> to vector<8x32xbf16>
    %c0_133 = arith.constant 0 : index
    %c0_134 = arith.constant 0 : index
    %255 = vector.load %arg12[%c0_133, %c0_134] : memref<32x128xbf16, #tpu.memory_space<vmem>>, vector<32x128xbf16>
    %cst_135 = arith.constant dense<0.000000e+00> : vector<8x128xf32>
    %256 = tpu.matmul %254, %255, %cst_135 {dimension_numbers = #tpu.dot_dimension_numbers<[1], [0], [0], [1], [0, 0, 1, 1], [], []>} : vector<8x32xbf16>, vector<32x128xbf16>, vector<8x128xf32> -> vector<8x128xf32>
    %c0_136 = arith.constant 0 : index
    %c0_137 = arith.constant 0 : index
    %257 = vector.load %arg13[%c0_136, %c0_137] : memref<1x128xf32, #tpu.memory_space<vmem>>, vector<1x128xf32>
    %258 = vector.broadcast %257 : vector<1x128xf32> to vector<8x128xf32>
    %259 = arith.addf %256, %258 : vector<8x128xf32>
    %c0_138 = arith.constant 0 : index
    %c0_139 = arith.constant 0 : index
    %c0_140 = arith.constant 0 : index
    %260 = vector.load %arg14[%c0_138, %c0_139, %c0_140] : memref<1x8x128xf32, #tpu.memory_space<vmem>>, vector<1x8x128xf32>
    %261 = vector.shape_cast %260 : vector<1x8x128xf32> to vector<8x128xf32>
    %262 = vector.shape_cast %259 : vector<8x128xf32> to vector<1x8x128xf32>
    tpu.vector_store %arg14[%c0_138, %c0_139, %c0_140], %262 {strides = array<i32>} : memref<1x8x128xf32, #tpu.memory_space<vmem>>, vector<1x8x128xf32>,
    return
  }
  func.func @transform_0(%arg0: i32) -> (i32, i32, i32) {
    %c0_i32 = arith.constant 0 : i32
    %c0_i32_0 = arith.constant 0 : i32
    %c0_i32_1 = arith.constant 0 : i32
    return %arg0, %c0_i32, %c0_i32_0 : i32, i32, i32
  }
  func.func @transform_1(%arg0: i32) -> (i32, i32) {
    %c0_i32 = arith.constant 0 : i32
    %c0_i32_0 = arith.constant 0 : i32
    %c0_i32_1 = arith.constant 0 : i32
    return %c0_i32, %c0_i32_0 : i32, i32
  }
  func.func @transform_2(%arg0: i32) -> (i32, i32) {
    %c0_i32 = arith.constant 0 : i32
    %c0_i32_0 = arith.constant 0 : i32
    %c0_i32_1 = arith.constant 0 : i32
    return %c0_i32, %c0_i32_0 : i32, i32
  }
  func.func @transform_3(%arg0: i32) -> (i32, i32) {
    %c0_i32 = arith.constant 0 : i32
    %c0_i32_0 = arith.constant 0 : i32
    %c0_i32_1 = arith.constant 0 : i32
    return %c0_i32, %c0_i32_0 : i32, i32
  }
  func.func @transform_4(%arg0: i32) -> (i32, i32) {
    %c0_i32 = arith.constant 0 : i32
    %c0_i32_0 = arith.constant 0 : i32
    %c0_i32_1 = arith.constant 0 : i32
    return %c0_i32, %c0_i32_0 : i32, i32
  }
  func.func @transform_5(%arg0: i32) -> (i32, i32) {
    %c0_i32 = arith.constant 0 : i32
    %c0_i32_0 = arith.constant 0 : i32
    %c0_i32_1 = arith.constant 0 : i32
    return %c0_i32, %c0_i32_0 : i32, i32
  }
  func.func @transform_6(%arg0: i32) -> (i32, i32) {
    %c0_i32 = arith.constant 0 : i32
    %c0_i32_0 = arith.constant 0 : i32
    %c0_i32_1 = arith.constant 0 : i32
    return %c0_i32, %c0_i32_0 : i32, i32
  }
  func.func @transform_7(%arg0: i32) -> (i32, i32) {
    %c0_i32 = arith.constant 0 : i32
    %c0_i32_0 = arith.constant 0 : i32
    %c0_i32_1 = arith.constant 0 : i32
    return %c0_i32, %c0_i32_0 : i32, i32
  }
  func.func @transform_8(%arg0: i32) -> (i32, i32) {
    %c0_i32 = arith.constant 0 : i32
    %c0_i32_0 = arith.constant 0 : i32
    %c0_i32_1 = arith.constant 0 : i32
    return %c0_i32, %c0_i32_0 : i32, i32
  }
  func.func @transform_9(%arg0: i32) -> (i32, i32) {
    %c0_i32 = arith.constant 0 : i32
    %c0_i32_0 = arith.constant 0 : i32
    %c0_i32_1 = arith.constant 0 : i32
    return %c0_i32, %c0_i32_0 : i32, i32
  }
  func.func @transform_10(%arg0: i32) -> (i32, i32) {
    %c0_i32 = arith.constant 0 : i32
    %c0_i32_0 = arith.constant 0 : i32
    %c0_i32_1 = arith.constant 0 : i32
    return %c0_i32, %c0_i32_0 : i32, i32
  }
  func.func @transform_11(%arg0: i32) -> (i32, i32) {
    %c0_i32 = arith.constant 0 : i32
    %c0_i32_0 = arith.constant 0 : i32
    %c0_i32_1 = arith.constant 0 : i32
    return %c0_i32, %c0_i32_0 : i32, i32
  }
  func.func @transform_12(%arg0: i32) -> (i32, i32) {
    %c0_i32 = arith.constant 0 : i32
    %c0_i32_0 = arith.constant 0 : i32
    %c0_i32_1 = arith.constant 0 : i32
    return %c0_i32, %c0_i32_0 : i32, i32
  }
  func.func @transform_13(%arg0: i32) -> (i32, i32, i32) {
    %c0_i32 = arith.constant 0 : i32
    %c0_i32_0 = arith.constant 0 : i32
    %c0_i32_1 = arith.constant 0 : i32
    return %arg0, %c0_i32, %c0_i32_0 : i32, i32, i32
  }
}

</mosaic_0001>

<llo_original>
// kernel: tpu_custom_call.1
$region0: #{tpu_custom_call.1}
  #allocation0 [shape = 'u32[]', space=smem, size = 0x4, offset = 0x4, fixed_abs, tag = 'smem constant byte address 0x4 - core index']
  #allocation1 [shape = 'u32[72,128]{1,0:T(1,128)}', space=vmem, size = 0x9000, scoped, tag = 'internal scratch']
  #allocation2 [shape = 'f32[8,24]{1,0:T(8,128)}', space=vmem, size = 0x1000, scoped, tag = 'scratch operand']
  #allocation3 [shape = 'f32[8,32]{1,0:T(8,128)}', space=vmem, size = 0x1000, scoped, tag = 'scratch operand']
  %s0 = inlined_call_operand.vmem [shape: f32[2,8,32], index: 0, kind: input, shape index: {}]
  %s1 = inlined_call_operand.vmem [shape: bf16[32,96], index: 1, kind: input, shape index: {}]
  %s2 = inlined_call_operand.vmem [shape: f32[1,96], index: 2, kind: input, shape index: {}]
  %s3 = inlined_call_operand.vmem [shape: bf16[32,32], index: 3, kind: input, shape index: {}]
  %s4 = inlined_call_operand.vmem [shape: f32[1,32], index: 4, kind: input, shape index: {}]
  %s5 = inlined_call_operand.vmem [shape: f32[1,32], index: 5, kind: input, shape index: {}]
  %s6 = inlined_call_operand.vmem [shape: f32[1,32], index: 6, kind: input, shape index: {}]
  %s7 = inlined_call_operand.vmem [shape: bf16[32,128], index: 7, kind: input, shape index: {}]
  %s8 = inlined_call_operand.vmem [shape: f32[1,128], index: 8, kind: input, shape index: {}]
  %s9 = inlined_call_operand.vmem [shape: bf16[128,32], index: 9, kind: input, shape index: {}]
  %s10 = inlined_call_operand.vmem [shape: f32[1,32], index: 10, kind: input, shape index: {}]
  %s11 = inlined_call_operand.vmem [shape: bf16[32,128], index: 11, kind: input, shape index: {}]
  %s12 = inlined_call_operand.vmem [shape: f32[1,128], index: 12, kind: input, shape index: {}]
  %s13 = inlined_call_operand.hbm [shape: f32[2,8,128], index: 13, kind: output, shape index: {}]
  %s14 = sld [smem:[#allocation0]]
  $region85: #{tpu_custom_call.1} parent=0
    _
  %s16 = ssub.s32 1, %s14
  %s17 = scalar_select 0, %s16, %s14
  $region1: #{tpu_custom_call.1} parent=0
    #allocation4 [shape = 'u8[8192]{0}', space=vmem, size = 0x2000, scoped, tag = 'output window, operand 0']
    #allocation5 [shape = 's32[2]{0}', space=sflag, size = 0x8, scoped, tag = 'scoped memory for tpu_custom_call.1']
    %18 = vsyncpa [#allocation5], 0
    %s19 = scalar_lea.sflag [#allocation5], 1
    %20 = vsyncpa %s19, 0
    loop: start=0, step=1, limit=4
    $region2: #{tpu_custom_call.1} parent=1 // loop_pre_header
      _
    $region3: #{tpu_custom_call.1} parent=1 // loop_header
      %s22 = sphi 0, %s26
      %p23 = scmp.ge.s32.totalorder %s22, 4
      %s32 = sphi 0, %s34
      %s35 = sphi 0, %s32
      %s36 = sphi 0, %s35
      %s52 = sphi 0, %s36
      %s56 = sphi 0, %s56
      %s58 = sphi 0, %s56
      %s59 = sphi 0, %s58
      %s73 = sphi 0, %s59
      %s77 = sphi 0, %s77
      %s79 = sphi 0, %s77
      %s80 = sphi 0, %s79
      %s94 = sphi 0, %s80
      %s98 = sphi 0, %s98
      %s100 = sphi 0, %s98
      %s101 = sphi 0, %s100
      %s115 = sphi 0, %s101
      %s119 = sphi 0, %s119
      %s121 = sphi 0, %s119
      %s122 = sphi 0, %s121
      %s136 = sphi 0, %s122
      %s140 = sphi 0, %s140
      %s142 = sphi 0, %s140
      %s143 = sphi 0, %s142
      %s157 = sphi 0, %s143
      %s161 = sphi 0, %s161
      %s163 = sphi 0, %s161
      %s164 = sphi 0, %s163
      %s178 = sphi 0, %s164
      %s182 = sphi 0, %s182
      %s184 = sphi 0, %s182
      %s185 = sphi 0, %s184
      %s199 = sphi 0, %s185
      %s203 = sphi 0, %s203
      %s205 = sphi 0, %s203
      %s206 = sphi 0, %s205
      %s220 = sphi 0, %s206
      %s224 = sphi 0, %s224
      %s226 = sphi 0, %s224
      %s227 = sphi 0, %s226
      %s241 = sphi 0, %s227
      %s245 = sphi 0, %s245
      %s247 = sphi 0, %s245
      %s248 = sphi 0, %s247
      %s262 = sphi 0, %s248
      %s266 = sphi 0, %s266
      %s268 = sphi 0, %s266
      %s269 = sphi 0, %s268
      %s283 = sphi 0, %s269
      %s287 = sphi 0, %s287
      %s289 = sphi 0, %s287
      %s290 = sphi 0, %s289
      %s304 = sphi 0, %s290
      %s310 = sphi 0, %s312
      %s313 = sphi 0, %s310
      %s314 = sphi 0, %s313
      %s330 = sphi 0, %s314
    $region4: #{tpu_custom_call.1} parent=1 // loop_header_branch
      %25 = sbr.rel (%p23) target = $region8
    $region5: #{tpu_custom_call.1} parent=1 // loop_body
      %s27 = ssub.s32 %s22, 1
      %s28 = ssub.s32 %s22, 2
      %s29 = sadd.s32 %s22, 1
      %s30 = ssub.s32 %s22, %s29
      %p31 = scmp.eq.s32.totalorder %s30, 0
      %s33 = sadd.s32 %s32, 1
      %s34 = scalar_select %p31, %s32, %s33
      %p37 = pneg %p31
      %p38 = scmp.eq.s32.totalorder %s22, 1
      %p39 = por %p37, %p38
      %p40 = scmp.ne.s32.totalorder %s32, %s35
      %p41 = scmp.eq.s32.totalorder %s22, 0
      %p42 = por %p40, %p41
      %p43 = scmp.ne.s32.totalorder %s32, %s35
      %p44 = scmp.eq.s32.totalorder %s27, 1
      %p45 = por %p43, %p44
      %p46 = scmp.ne.s32.totalorder %s35, %s36
      %p47 = scmp.eq.s32.totalorder %s27, 0
      %p48 = por %p46, %p47
      %p49 = scmp.ne.s32.totalorder %s35, %s36
      %p50 = scmp.eq.s32.totalorder %s28, 1
      %p51 = por %p49, %p50
      %p53 = scmp.ne.s32.totalorder %s36, %s52
      %p54 = scmp.eq.s32.totalorder %s28, 0
      %p55 = por %p53, %p54
      %s57 = sadd.s32 %s56, 1
      %p60 = scmp.eq.s32.totalorder %s22, 1
      %p61 = scmp.ne.s32.totalorder %s56, %s58
      %p62 = scmp.eq.s32.totalorder %s22, 0
      %p63 = por %p61, %p62
      %p64 = scmp.ne.s32.totalorder %s56, %s58
      %p65 = scmp.eq.s32.totalorder %s27, 1
      %p66 = por %p64, %p65
      %p67 = scmp.ne.s32.totalorder %s58, %s59
      %p68 = scmp.eq.s32.totalorder %s27, 0
      %p69 = por %p67, %p68
      %p70 = scmp.ne.s32.totalorder %s58, %s59
      %p71 = scmp.eq.s32.totalorder %s28, 1
      %p72 = por %p70, %p71
      %p74 = scmp.ne.s32.totalorder %s59, %s73
      %p75 = scmp.eq.s32.totalorder %s28, 0
      %p76 = por %p74, %p75
      %s78 = sadd.s32 %s77, 1
      %p81 = scmp.eq.s32.totalorder %s22, 1
      %p82 = scmp.ne.s32.totalorder %s77, %s79
      %p83 = scmp.eq.s32.totalorder %s22, 0
      %p84 = por %p82, %p83
      %p85 = scmp.ne.s32.totalorder %s77, %s79
      %p86 = scmp.eq.s32.totalorder %s27, 1
      %p87 = por %p85, %p86
      %p88 = scmp.ne.s32.totalorder %s79, %s80
      %p89 = scmp.eq.s32.totalorder %s27, 0
      %p90 = por %p88, %p89
      %p91 = scmp.ne.s32.totalorder %s79, %s80
      %p92 = scmp.eq.s32.totalorder %s28, 1
      %p93 = por %p91, %p92
      %p95 = scmp.ne.s32.totalorder %s80, %s94
      %p96 = scmp.eq.s32.totalorder %s28, 0
      %p97 = por %p95, %p96
      %s99 = sadd.s32 %s98, 1
      %p102 = scmp.eq.s32.totalorder %s22, 1
      %p103 = scmp.ne.s32.totalorder %s98, %s100
      %p104 = scmp.eq.s32.totalorder %s22, 0
      %p105 = por %p103, %p104
      %p106 = scmp.ne.s32.totalorder %s98, %s100
      %p107 = scmp.eq.s32.totalorder %s27, 1
      %p108 = por %p106, %p107
      %p109 = scmp.ne.s32.totalorder %s100, %s101
      %p110 = scmp.eq.s32.totalorder %s27, 0
      %p111 = por %p109, %p110
      %p112 = scmp.ne.s32.totalorder %s100, %s101
      %p113 = scmp.eq.s32.totalorder %s28, 1
      %p114 = por %p112, %p113
      %p116 = scmp.ne.s32.totalorder %s101, %s115
      %p117 = scmp.eq.s32.totalorder %s28, 0
      %p118 = por %p116, %p117
      %s120 = sadd.s32 %s119, 1
      %p123 = scmp.eq.s32.totalorder %s22, 1
      %p124 = scmp.ne.s32.totalorder %s119, %s121
      %p125 = scmp.eq.s32.totalorder %s22, 0
      %p126 = por %p124, %p125
      %p127 = scmp.ne.s32.totalorder %s119, %s121
      %p128 = scmp.eq.s32.totalorder %s27, 1
      %p129 = por %p127, %p128
      %p130 = scmp.ne.s32.totalorder %s121, %s122
      %p131 = scmp.eq.s32.totalorder %s27, 0
      %p132 = por %p130, %p131
      %p133 = scmp.ne.s32.totalorder %s121, %s122
      %p134 = scmp.eq.s32.totalorder %s28, 1
      %p135 = por %p133, %p134
      %p137 = scmp.ne.s32.totalorder %s122, %s136
      %p138 = scmp.eq.s32.totalorder %s28, 0
      %p139 = por %p137, %p138
      %s141 = sadd.s32 %s140, 1
      %p144 = scmp.eq.s32.totalorder %s22, 1
      %p145 = scmp.ne.s32.totalorder %s140, %s142
      %p146 = scmp.eq.s32.totalorder %s22, 0
      %p147 = por %p145, %p146
      %p148 = scmp.ne.s32.totalorder %s140, %s142
      %p149 = scmp.eq.s32.totalorder %s27, 1
      %p150 = por %p148, %p149
      %p151 = scmp.ne.s32.totalorder %s142, %s143
      %p152 = scmp.eq.s32.totalorder %s27, 0
      %p153 = por %p151, %p152
      %p154 = scmp.ne.s32.totalorder %s142, %s143
      %p155 = scmp.eq.s32.totalorder %s28, 1
      %p156 = por %p154, %p155
      %p158 = scmp.ne.s32.totalorder %s143, %s157
      %p159 = scmp.eq.s32.totalorder %s28, 0
      %p160 = por %p158, %p159
      %s162 = sadd.s32 %s161, 1
      %p165 = scmp.eq.s32.totalorder %s22, 1
      %p166 = scmp.ne.s32.totalorder %s161, %s163
      %p167 = scmp.eq.s32.totalorder %s22, 0
      %p168 = por %p166, %p167
      %p169 = scmp.ne.s32.totalorder %s161, %s163
      %p170 = scmp.eq.s32.totalorder %s27, 1
      %p171 = por %p169, %p170
      %p172 = scmp.ne.s32.totalorder %s163, %s164
      %p173 = scmp.eq.s32.totalorder %s27, 0
      %p174 = por %p172, %p173
      %p175 = scmp.ne.s32.totalorder %s163, %s164
      %p176 = scmp.eq.s32.totalorder %s28, 1
      %p177 = por %p175, %p176
      %p179 = scmp.ne.s32.totalorder %s164, %s178
      %p180 = scmp.eq.s32.totalorder %s28, 0
      %p181 = por %p179, %p180
      %s183 = sadd.s32 %s182, 1
      %p186 = scmp.eq.s32.totalorder %s22, 1
      %p187 = scmp.ne.s32.totalorder %s182, %s184
      %p188 = scmp.eq.s32.totalorder %s22, 0
      %p189 = por %p187, %p188
      %p190 = scmp.ne.s32.totalorder %s182, %s184
      %p191 = scmp.eq.s32.totalorder %s27, 1
      %p192 = por %p190, %p191
      %p193 = scmp.ne.s32.totalorder %s184, %s185
      %p194 = scmp.eq.s32.totalorder %s27, 0
      %p195 = por %p193, %p194
      %p196 = scmp.ne.s32.totalorder %s184, %s185
      %p197 = scmp.eq.s32.totalorder %s28, 1
      %p198 = por %p196, %p197
      %p200 = scmp.ne.s32.totalorder %s185, %s199
      %p201 = scmp.eq.s32.totalorder %s28, 0
      %p202 = por %p200, %p201
      %s204 = sadd.s32 %s203, 1
      %p207 = scmp.eq.s32.totalorder %s22, 1
      %p208 = scmp.ne.s32.totalorder %s203, %s205
      %p209 = scmp.eq.s32.totalorder %s22, 0
      %p210 = por %p208, %p209
      %p211 = scmp.ne.s32.totalorder %s203, %s205
      %p212 = scmp.eq.s32.totalorder %s27, 1
      %p213 = por %p211, %p212
      %p214 = scmp.ne.s32.totalorder %s205, %s206
      %p215 = scmp.eq.s32.totalorder %s27, 0
      %p216 = por %p214, %p215
      %p217 = scmp.ne.s32.totalorder %s205, %s206
      %p218 = scmp.eq.s32.totalorder %s28, 1
      %p219 = por %p217, %p218
      %p221 = scmp.ne.s32.totalorder %s206, %s220
      %p222 = scmp.eq.s32.totalorder %s28, 0
      %p223 = por %p221, %p222
      %s225 = sadd.s32 %s224, 1
      %p228 = scmp.eq.s32.totalorder %s22, 1
      %p229 = scmp.ne.s32.totalorder %s224, %s226
      %p230 = scmp.eq.s32.totalorder %s22, 0
      %p231 = por %p229, %p230
      %p232 = scmp.ne.s32.totalorder %s224, %s226
      %p233 = scmp.eq.s32.totalorder %s27, 1
      %p234 = por %p232, %p233
      %p235 = scmp.ne.s32.totalorder %s226, %s227
      %p236 = scmp.eq.s32.totalorder %s27, 0
      %p237 = por %p235, %p236
      %p238 = scmp.ne.s32.totalorder %s226, %s227
      %p239 = scmp.eq.s32.totalorder %s28, 1
      %p240 = por %p238, %p239
      %p242 = scmp.ne.s32.totalorder %s227, %s241
      %p243 = scmp.eq.s32.totalorder %s28, 0
      %p244 = por %p242, %p243
      %s246 = sadd.s32 %s245, 1
      %p249 = scmp.eq.s32.totalorder %s22, 1
      %p250 = scmp.ne.s32.totalorder %s245, %s247
      %p251 = scmp.eq.s32.totalorder %s22, 0
      %p252 = por %p250, %p251
      %p253 = scmp.ne.s32.totalorder %s245, %s247
      %p254 = scmp.eq.s32.totalorder %s27, 1
      %p255 = por %p253, %p254
      %p256 = scmp.ne.s32.totalorder %s247, %s248
      %p257 = scmp.eq.s32.totalorder %s27, 0
      %p258 = por %p256, %p257
      %p259 = scmp.ne.s32.totalorder %s247, %s248
      %p260 = scmp.eq.s32.totalorder %s28, 1
      %p261 = por %p259, %p260
      %p263 = scmp.ne.s32.totalorder %s248, %s262
      %p264 = scmp.eq.s32.totalorder %s28, 0
      %p265 = por %p263, %p264
      %s267 = sadd.s32 %s266, 1
      %p270 = scmp.eq.s32.totalorder %s22, 1
      %p271 = scmp.ne.s32.totalorder %s266, %s268
      %p272 = scmp.eq.s32.totalorder %s22, 0
      %p273 = por %p271, %p272
      %p274 = scmp.ne.s32.totalorder %s266, %s268
      %p275 = scmp.eq.s32.totalorder %s27, 1
      %p276 = por %p274, %p275
      %p277 = scmp.ne.s32.totalorder %s268, %s269
      %p278 = scmp.eq.s32.totalorder %s27, 0
      %p279 = por %p277, %p278
      %p280 = scmp.ne.s32.totalorder %s268, %s269
      %p281 = scmp.eq.s32.totalorder %s28, 1
      %p282 = por %p280, %p281
      %p284 = scmp.ne.s32.totalorder %s269, %s283
      %p285 = scmp.eq.s32.totalorder %s28, 0
      %p286 = por %p284, %p285
      %s288 = sadd.s32 %s287, 1
      %p291 = scmp.eq.s32.totalorder %s22, 1
      %p292 = scmp.ne.s32.totalorder %s287, %s289
      %p293 = scmp.eq.s32.totalorder %s22, 0
      %p294 = por %p292, %p293
      %p295 = scmp.ne.s32.totalorder %s287, %s289
      %p296 = scmp.eq.s32.totalorder %s27, 1
      %p297 = por %p295, %p296
      %p298 = scmp.ne.s32.totalorder %s289, %s290
      %p299 = scmp.eq.s32.totalorder %s27, 0
      %p300 = por %p298, %p299
      %p301 = scmp.ne.s32.totalorder %s289, %s290
      %p302 = scmp.eq.s32.totalorder %s28, 1
      %p303 = por %p301, %p302
      %p305 = scmp.ne.s32.totalorder %s290, %s304
      %p306 = scmp.eq.s32.totalorder %s28, 0
      %p307 = por %p305, %p306
      %s308 = ssub.s32 %s22, %s29
      %p309 = scmp.eq.s32.totalorder %s308, 0
      %s311 = sadd.s32 %s310, 1
      %s312 = scalar_select %p309, %s310, %s311
      %p315 = pneg %p309
      %p316 = scmp.eq.s32.totalorder %s22, 1
      %p317 = por %p315, %p316
      %p318 = scmp.ne.s32.totalorder %s310, %s313
      %p319 = scmp.eq.s32.totalorder %s22, 0
      %p320 = por %p318, %p319
      %p321 = scmp.ne.s32.totalorder %s310, %s313
      %p322 = scmp.eq.s32.totalorder %s27, 1
      %p323 = por %p321, %p322
      %p324 = scmp.ne.s32.totalorder %s313, %s314
      %p325 = scmp.eq.s32.totalorder %s27, 0
      %p326 = por %p324, %p325
      %p327 = scmp.ne.s32.totalorder %s313, %s314
      %p328 = scmp.eq.s32.totalorder %s28, 1
      %p329 = por %p327, %p328
      %p331 = scmp.ne.s32.totalorder %s314, %s330
      %p332 = scmp.eq.s32.totalorder %s28, 0
      %p333 = por %p331, %p332
      %p334 = scmp.le.s32.totalorder 1, %s22
      %p335 = scmp.lt.s32.totalorder %s22, 3
      %p336 = pnand %p334, %p335
      %p337 = pneg %p336
      // Predicated region
      $region9: #{tpu_custom_call.1} parent=5 // pred_check
        _
      $region10: #{tpu_custom_call.1} parent=5 // pred_check_branch
        %339 = sbr.rel (%p336) target = $region12
      $region11: #{tpu_custom_call.1} parent=5 // pred_region
        %s340 = ssub.s32 %s22, 1
        // Predicated region
        $region13: #{tpu_custom_call.1} parent=11 // pred_check
          %p341 = pneg %p69
        $region14: #{tpu_custom_call.1} parent=11 // pred_check_branch
          %343 = sbr.rel (%p341) target = $region16
        $region15: #{tpu_custom_call.1} parent=11 // pred_region
          _
        $region16: #{tpu_custom_call.1} parent=11 // pred_fallthru
          _
        // Predicated region
        $region17: #{tpu_custom_call.1} parent=11 // pred_check
          %p344 = pneg %p90
        $region18: #{tpu_custom_call.1} parent=11 // pred_check_branch
          %346 = sbr.rel (%p344) target = $region20
        $region19: #{tpu_custom_call.1} parent=11 // pred_region
          _
        $region20: #{tpu_custom_call.1} parent=11 // pred_fallthru
          _
        // Predicated region
        $region21: #{tpu_custom_call.1} parent=11 // pred_check
          %p347 = pneg %p111
        $region22: #{tpu_custom_call.1} parent=11 // pred_check_branch
          %349 = sbr.rel (%p347) target = $region24
        $region23: #{tpu_custom_call.1} parent=11 // pred_region
          _
        $region24: #{tpu_custom_call.1} parent=11 // pred_fallthru
          _
        // Predicated region
        $region25: #{tpu_custom_call.1} parent=11 // pred_check
          %p350 = pneg %p132
        $region26: #{tpu_custom_call.1} parent=11 // pred_check_branch
          %352 = sbr.rel (%p350) target = $region28
        $region27: #{tpu_custom_call.1} parent=11 // pred_region
          _
        $region28: #{tpu_custom_call.1} parent=11 // pred_fallthru
          _
        // Predicated region
        $region29: #{tpu_custom_call.1} parent=11 // pred_check
          %p353 = pneg %p153
        $region30: #{tpu_custom_call.1} parent=11 // pred_check_branch
          %355 = sbr.rel (%p353) target = $region32
        $region31: #{tpu_custom_call.1} parent=11 // pred_region
          _
        $region32: #{tpu_custom_call.1} parent=11 // pred_fallthru
          _
        // Predicated region
        $region33: #{tpu_custom_call.1} parent=11 // pred_check
          %p356 = pneg %p174
        $region34: #{tpu_custom_call.1} parent=11 // pred_check_branch
          %358 = sbr.rel (%p356) target = $region36
        $region35: #{tpu_custom_call.1} parent=11 // pred_region
          _
        $region36: #{tpu_custom_call.1} parent=11 // pred_fallthru
          _
        // Predicated region
        $region37: #{tpu_custom_call.1} parent=11 // pred_check
          %p359 = pneg %p195
        $region38: #{tpu_custom_call.1} parent=11 // pred_check_branch
          %361 = sbr.rel (%p359) target = $region40
        $region39: #{tpu_custom_call.1} parent=11 // pred_region
          _
        $region40: #{tpu_custom_call.1} parent=11 // pred_fallthru
          _
        // Predicated region
        $region41: #{tpu_custom_call.1} parent=11 // pred_check
          %p362 = pneg %p216
        $region42: #{tpu_custom_call.1} parent=11 // pred_check_branch
          %364 = sbr.rel (%p362) target = $region44
        $region43: #{tpu_custom_call.1} parent=11 // pred_region
          _
        $region44: #{tpu_custom_call.1} parent=11 // pred_fallthru
          _
        // Predicated region
        $region45: #{tpu_custom_call.1} parent=11 // pred_check
          %p365 = pneg %p237
        $region46: #{tpu_custom_call.1} parent=11 // pred_check_branch
          %367 = sbr.rel (%p365) target = $region48
        $region47: #{tpu_custom_call.1} parent=11 // pred_region
          _
        $region48: #{tpu_custom_call.1} parent=11 // pred_fallthru
          _
        // Predicated region
        $region49: #{tpu_custom_call.1} parent=11 // pred_check
          %p368 = pneg %p258
        $region50: #{tpu_custom_call.1} parent=11 // pred_check_branch
          %370 = sbr.rel (%p368) target = $region52
        $region51: #{tpu_custom_call.1} parent=11 // pred_region
          _
        $region52: #{tpu_custom_call.1} parent=11 // pred_fallthru
          _
        // Predicated region
        $region53: #{tpu_custom_call.1} parent=11 // pred_check
          %p371 = pneg %p279
        $region54: #{tpu_custom_call.1} parent=11 // pred_check_branch
          %373 = sbr.rel (%p371) target = $region56
        $region55: #{tpu_custom_call.1} parent=11 // pred_region
          _
        $region56: #{tpu_custom_call.1} parent=11 // pred_fallthru
          _
        // Predicated region
        $region57: #{tpu_custom_call.1} parent=11 // pred_check
          %p374 = pneg %p300
        $region58: #{tpu_custom_call.1} parent=11 // pred_check_branch
          %376 = sbr.rel (%p374) target = $region60
        $region59: #{tpu_custom_call.1} parent=11 // pred_region
          _
        $region60: #{tpu_custom_call.1} parent=11 // pred_fallthru
          _
      $region12: #{tpu_custom_call.1} parent=5 // pred_fallthru
        _
      %p377 = scmp.lt.s32.totalorder %s22, 2
      // Predicated region
      $region61: #{tpu_custom_call.1} parent=5 // pred_check
        %p378 = pneg %p377
      $region62: #{tpu_custom_call.1} parent=5 // pred_check_branch
        %380 = sbr.rel (%p378) target = $region64
      $region63: #{tpu_custom_call.1} parent=5 // pred_region
        // Predicated region
        $region65: #{tpu_custom_call.1} parent=63 // pred_check
          %p381 = pneg %p42
        $region66: #{tpu_custom_call.1} parent=63 // pred_check_branch
          %383 = sbr.rel (%p381) target = $region68
        $region67: #{tpu_custom_call.1} parent=63 // pred_region
          %p384 = scmp.lt.s32.totalorder %s22, 1
          %s385 = scalar_select %p384, %s22, 1
          %s386 = smul.addr %s385, 8
          %s387 = scalar_lea.vmem %s0, %s386
        $region68: #{tpu_custom_call.1} parent=63 // pred_fallthru
          _
      $region64: #{tpu_custom_call.1} parent=5 // pred_fallthru
        _
      %p388 = scmp.le.s32.totalorder 1, %s22
      %p389 = scmp.lt.s32.totalorder %s22, 3
      %p390 = pnand %p388, %p389
      %p391 = pneg %p390
      // Predicated region
      $region69: #{tpu_custom_call.1} parent=5 // pred_check
        _
      $region70: #{tpu_custom_call.1} parent=5 // pred_check_branch
        %393 = sbr.rel (%p390) target = $region72
      $region71: #{tpu_custom_call.1} parent=5 // pred_region
        %s394 = ssub.s32 %s22, 1
        %p395 = scmp.lt.s32.totalorder %s27, 1
        %s396 = scalar_select %p395, %s27, 1
        %s397 = smul.addr %s396, 8
        %s398 = scalar_lea.vmem %s0, %s397
        %p399 = pneg %p48
        %p400 = pneg %p45
        %p401 = pneg %p69
        %p402 = pneg %p66
        %p403 = pneg %p90
        %p404 = pneg %p87
        %p405 = pneg %p111
        %p406 = pneg %p108
        %p407 = pneg %p132
        %p408 = pneg %p129
        %p409 = pneg %p153
        %p410 = pneg %p150
        %p411 = pneg %p174
        %p412 = pneg %p171
        %p413 = pneg %p195
        %p414 = pneg %p192
        %p415 = pneg %p216
        %p416 = pneg %p213
        %p417 = pneg %p237
        %p418 = pneg %p234
        %p419 = pneg %p258
        %p420 = pneg %p255
        %p421 = pneg %p279
        %p422 = pneg %p276
        %p423 = pneg %p300
        %p424 = pneg %p297
        %p425 = pneg %p326
        %p426 = pneg %p323
        %s427 = sand.u32 %s313, 1
        %s428 = scalar_lea.sflag [#allocation5], %s427
        %s429 = sand.u32 %s313, 1
        %s430 = smul.addr %s429, 8
        %s431 = scalar_lea.vmem [#allocation4], %s430
        %p432 = scmp.lt.s32.totalorder %s27, 1
        %s433 = scalar_select %p432, %s27, 1
        %s434 = smul.addr %s433, 8
        %s435 = scalar_lea.vmem %s0, %s434
        %v437 = vld [vmem:[%s435] sm:$0xff]
        %v438 = vpack.c.bf16 %v437, %v437
        %v439 = vld [vmem:[%s1] sm:$0xf]
        %v440 = vld [vmem:[%s1 + $0x4] sm:$0xf]
        %v441 = vld [vmem:[%s1 + $0x8] sm:$0xf]
        %v442 = vld [vmem:[%s1 + $0xc] sm:$0xf]
        %v443 = vld [vmem:[%s2] sm:$0x1]
        %v445 = vperm.slane %v443, 0
        %v451 = vunpack.c.l.b16 %v439
        %v452 = vunpack.c.l.b16 %v440
        %v453 = vunpack.c.l.b16 %v441
        %v454 = vunpack.c.l.b16 %v442
        %v455 = vpack.c.b16 %v452, %v451
        %v456 = vpack.c.b16 %v454, %v453
        %vm459 = vcmask 261120
        %v461 = vsel %vm459, %v438, 0
        %463 = vmatpush.bf16.msra.mxu0 0
        %464 = vmatpush.bf16.msra.mxu0 0
        %465 = vmatpush.bf16.msra.mxu0 0
        %466 = vmatpush.bf16.msra.mxu0 0
        %467 = vmatpush.bf16.msra.mxu0 0
        %468 = vmatpush.bf16.msra.mxu0 0
        %469 = vmatpush.bf16.msra.mxu0 %v456
        %470 = vmatpush.bf16.msra.mxu0 %v455
        %471 = vmatmul.bf16.gmra.mxu0 %v461
        %v472 = vpop.f32.mrf.mxu0
        %v473 = vadd.f32 %v445, %v472
        %v474 = vpop.f32.mrf.mxu0
        %475 = vdwg.mxu0
        %vm476 = vcmask 189440
        %477 = vst.msk [vmem:[#allocation2] sm:$0x3] %vm476, %v473
        %479 = vrot.lane.b32.xlu0 %v473, 104
        %v480 = vpop.permute.xlu0 %479
        %482 = vst.msk [vmem:[#allocation2 + $0x2] sm:$0x3] %vm476, %v480
        %483 = vrot.lane.b32.xlu0 %v473, 80
        %v484 = vpop.permute.xlu0 %483
        %486 = vst.msk [vmem:[#allocation2 + $0x4] sm:$0x3] %vm476, %v484
        %487 = vrot.lane.b32.xlu0 %v473, 56
        %v488 = vpop.permute.xlu0 %487
        %490 = vst.msk [vmem:[#allocation2 + $0x6] sm:$0x3] %vm476, %v488
        %v491 = vld [vmem:[#allocation2] sm:$0xff]
        %v492 = vpack.c.bf16 %v491, %v491
        %494 = vrot.lane.b32.xlu0 %v492, 120
        %v495 = vpop.permute.xlu0 %494
        %vm496 = vcmask 64512
        %v498 = vsel %vm496, %v492, 0
        %v501 = vsel %vm496, %v495, 0
        %503 = vmatpush.bf16.xpose.msra.mxu0 0
        %504 = vmatpush.bf16.xpose.msra.mxu0 0
        %505 = vmatpush.bf16.xpose.msra.mxu0 0
        %506 = vmatpush.bf16.xpose.msra.mxu0 0
        %507 = vmatpush.bf16.xpose.msra.mxu0 0
        %508 = vmatpush.bf16.xpose.msra.mxu0 0
        %509 = vmatpush.bf16.xpose.msra.mxu0 0
        %510 = vmatpush.bf16.xpose.msra.mxu0 %v501
        %511 = vmatmul.bf16.gmra.mxu0 %v498
        %v512 = vpop.f32.mrf.mxu0
        %v513 = vadd.f32 0.0, %v512
        %v514 = vpop.f32.mrf.mxu0
        %515 = vdwg.mxu0
        %v516 = vsel %vm496, %v513, -inf
        %517 = vmax.xlane.f32.xlu0 %v516
        %v518 = vpop.xlane.xlu0 %517
        %v519 = vsub.f32 %v513, %v518
        %v520 = vmul.f32 %v519, 1.442695
        %v521 = vpow.pop %v520
        %v522 = vsel %vm496, %v521, 0.0
        %523 = vadd.xlane.f32.xlu0 %v522
        %v524 = vpop.xlane.xlu0 %523
        %v525 = vrcp.pop %v524
        %v526 = vmul.f32 %v521, %v525
        %v527 = vpack.c.bf16 %v526, %v526
        %528 = vrot.lane.b32.xlu0 %v492, 112
        %v529 = vpop.permute.xlu0 %528
        %v531 = vsel %vm496, %v527, 0
        %vm533 = vcmask 1043456
        %v535 = vsel %vm533, %v529, 0
        %537 = vmatpush.bf16.msra.mxu0 0
        %538 = vmatpush.bf16.msra.mxu0 0
        %539 = vmatpush.bf16.msra.mxu0 0
        %540 = vmatpush.bf16.msra.mxu0 0
        %541 = vmatpush.bf16.msra.mxu0 0
        %542 = vmatpush.bf16.msra.mxu0 0
        %543 = vmatpush.bf16.msra.mxu0 0
        %544 = vmatpush.bf16.msra.mxu0 %v535
        %545 = vmatmul.bf16.gmra.mxu0 %v531
        %v546 = vpop.f32.mrf.mxu0
        %v547 = vadd.f32 0.0, %v546
        %v548 = vpop.f32.mrf.mxu0
        %549 = vdwg.mxu0
        %vm550 = vcmask 58368
        %551 = vst.msk [vmem:[#allocation3] sm:$0x3] %vm550, %v547
        %553 = vrot.lane.b32.xlu0 %v547, 8
        %v554 = vpop.permute.xlu0 %553
        %vm556 = vcmask 126018
        %557 = vst.msk [vmem:[#allocation3 - $0x2] sm:$0xc] %vm556, %v554
        %558 = vrot.lane.b32.xlu0 %v547, 16
        %v559 = vpop.permute.xlu0 %558
        %vm561 = vcmask 193668
        %562 = vst.msk [vmem:[#allocation3 - $0x4] sm:$0x30] %vm561, %v559
        %563 = vrot.lane.b32.xlu0 %v547, 24
        %v564 = vpop.permute.xlu0 %563
        %vm566 = vcmask 261318
        %567 = vst.msk [vmem:[#allocation3 - $0x6] sm:$0xc0] %vm566, %v564
        %vm568 = vcmask 191490
        %569 = vst.msk [vmem:[#allocation2 - $0x2] sm:$0xc] %vm568, %v473
        %570 = vst.msk [vmem:[#allocation2] sm:$0xc] %vm568, %v480
        %571 = vst.msk [vmem:[#allocation2 + $0x2] sm:$0xc] %vm568, %v484
        %572 = vst.msk [vmem:[#allocation2 + $0x4] sm:$0xc] %vm568, %v488
        %v573 = vld [vmem:[#allocation2] sm:$0xff]
        %v574 = vpack.c.bf16 %v573, %v573
        %576 = vrot.lane.b32.xlu0 %v574, 120
        %v577 = vpop.permute.xlu0 %576
        %v579 = vsel %vm496, %v574, 0
        %v582 = vsel %vm496, %v577, 0
        %584 = vmatpush.bf16.xpose.msra.mxu0 0
        %585 = vmatpush.bf16.xpose.msra.mxu0 0
        %586 = vmatpush.bf16.xpose.msra.mxu0 0
        %587 = vmatpush.bf16.xpose.msra.mxu0 0
        %588 = vmatpush.bf16.xpose.msra.mxu0 0
        %589 = vmatpush.bf16.xpose.msra.mxu0 0
        %590 = vmatpush.bf16.xpose.msra.mxu0 0
        %591 = vmatpush.bf16.xpose.msra.mxu0 %v582
        %592 = vmatmul.bf16.gmra.mxu0 %v579
        %v593 = vpop.f32.mrf.mxu0
        %v594 = vadd.f32 0.0, %v593
        %v595 = vpop.f32.mrf.mxu0
        %596 = vdwg.mxu0
        %v597 = vsel %vm496, %v594, -inf
        %598 = vmax.xlane.f32.xlu0 %v597
        %v599 = vpop.xlane.xlu0 %598
        %v600 = vsub.f32 %v594, %v599
        %v601 = vmul.f32 %v600, 1.442695
        %v602 = vpow.pop %v601
        %v603 = vsel %vm496, %v602, 0.0
        %604 = vadd.xlane.f32.xlu0 %v603
        %v605 = vpop.xlane.xlu0 %604
        %v606 = vrcp.pop %v605
        %v607 = vmul.f32 %v602, %v606
        %v608 = vpack.c.bf16 %v607, %v607
        %609 = vrot.lane.b32.xlu0 %v574, 112
        %v610 = vpop.permute.xlu0 %609
        %v612 = vsel %vm496, %v608, 0
        %v615 = vsel %vm533, %v610, 0
        %617 = vmatpush.bf16.msra.mxu0 0
        %618 = vmatpush.bf16.msra.mxu0 0
        %619 = vmatpush.bf16.msra.mxu0 0
        %620 = vmatpush.bf16.msra.mxu0 0
        %621 = vmatpush.bf16.msra.mxu0 0
        %622 = vmatpush.bf16.msra.mxu0 0
        %623 = vmatpush.bf16.msra.mxu0 0
        %624 = vmatpush.bf16.msra.mxu0 %v615
        %625 = vmatmul.bf16.gmra.mxu0 %v612
        %v626 = vpop.f32.mrf.mxu0
        %v627 = vadd.f32 0.0, %v626
        %v628 = vpop.f32.mrf.mxu0
        %629 = vdwg.mxu0
        %630 = vst.msk [vmem:[#allocation3 + $0x2] sm:$0x3] %vm550, %v627
        %632 = vrot.lane.b32.xlu0 %v627, 8
        %v633 = vpop.permute.xlu0 %632
        %635 = vst.msk [vmem:[#allocation3] sm:$0xc] %vm556, %v633
        %636 = vrot.lane.b32.xlu0 %v627, 16
        %v637 = vpop.permute.xlu0 %636
        %639 = vst.msk [vmem:[#allocation3 - $0x2] sm:$0x30] %vm561, %v637
        %640 = vrot.lane.b32.xlu0 %v627, 24
        %v641 = vpop.permute.xlu0 %640
        %643 = vst.msk [vmem:[#allocation3 - $0x4] sm:$0xc0] %vm566, %v641
        %vm644 = vcmask 193540
        %645 = vst.msk [vmem:[#allocation2 - $0x4] sm:$0x30] %vm644, %v473
        %646 = vst.msk [vmem:[#allocation2 - $0x2] sm:$0x30] %vm644, %v480
        %647 = vst.msk [vmem:[#allocation2] sm:$0x30] %vm644, %v484
        %648 = vst.msk [vmem:[#allocation2 + $0x2] sm:$0x30] %vm644, %v488
        %v649 = vld [vmem:[#allocation2] sm:$0xff]
        %v650 = vpack.c.bf16 %v649, %v649
        %652 = vrot.lane.b32.xlu0 %v650, 120
        %v653 = vpop.permute.xlu0 %652
        %v655 = vsel %vm496, %v650, 0
        %v658 = vsel %vm496, %v653, 0
        %660 = vmatpush.bf16.xpose.msra.mxu0 0
        %661 = vmatpush.bf16.xpose.msra.mxu0 0
        %662 = vmatpush.bf16.xpose.msra.mxu0 0
        %663 = vmatpush.bf16.xpose.msra.mxu0 0
        %664 = vmatpush.bf16.xpose.msra.mxu0 0
        %665 = vmatpush.bf16.xpose.msra.mxu0 0
        %666 = vmatpush.bf16.xpose.msra.mxu0 0
        %667 = vmatpush.bf16.xpose.msra.mxu0 %v658
        %668 = vmatmul.bf16.gmra.mxu0 %v655
        %v669 = vpop.f32.mrf.mxu0
        %v670 = vadd.f32 0.0, %v669
        %v671 = vpop.f32.mrf.mxu0
        %672 = vdwg.mxu0
        %v673 = vsel %vm496, %v670, -inf
        %674 = vmax.xlane.f32.xlu0 %v673
        %v675 = vpop.xlane.xlu0 %674
        %v676 = vsub.f32 %v670, %v675
        %v677 = vmul.f32 %v676, 1.442695
        %v678 = vpow.pop %v677
        %v679 = vsel %vm496, %v678, 0.0
        %680 = vadd.xlane.f32.xlu0 %v679
        %v681 = vpop.xlane.xlu0 %680
        %v682 = vrcp.pop %v681
        %v683 = vmul.f32 %v678, %v682
        %v684 = vpack.c.bf16 %v683, %v683
        %685 = vrot.lane.b32.xlu0 %v650, 112
        %v686 = vpop.permute.xlu0 %685
        %v688 = vsel %vm496, %v684, 0
        %v691 = vsel %vm533, %v686, 0
        %693 = vmatpush.bf16.msra.mxu0 0
        %694 = vmatpush.bf16.msra.mxu0 0
        %695 = vmatpush.bf16.msra.mxu0 0
        %696 = vmatpush.bf16.msra.mxu0 0
        %697 = vmatpush.bf16.msra.mxu0 0
        %698 = vmatpush.bf16.msra.mxu0 0
        %699 = vmatpush.bf16.msra.mxu0 0
        %700 = vmatpush.bf16.msra.mxu0 %v691
        %701 = vmatmul.bf16.gmra.mxu0 %v688
        %v702 = vpop.f32.mrf.mxu0
        %v703 = vadd.f32 0.0, %v702
        %v704 = vpop.f32.mrf.mxu0
        %705 = vdwg.mxu0
        %706 = vst.msk [vmem:[#allocation3 + $0x4] sm:$0x3] %vm550, %v703
        %708 = vrot.lane.b32.xlu0 %v703, 8
        %v709 = vpop.permute.xlu0 %708
        %711 = vst.msk [vmem:[#allocation3 + $0x2] sm:$0xc] %vm556, %v709
        %712 = vrot.lane.b32.xlu0 %v703, 16
        %v713 = vpop.permute.xlu0 %712
        %715 = vst.msk [vmem:[#allocation3] sm:$0x30] %vm561, %v713
        %716 = vrot.lane.b32.xlu0 %v703, 24
        %v717 = vpop.permute.xlu0 %716
        %719 = vst.msk [vmem:[#allocation3 - $0x2] sm:$0xc0] %vm566, %v717
        %vm720 = vcmask 195590
        %721 = vst.msk [vmem:[#allocation2 - $0x6] sm:$0xc0] %vm720, %v473
        %722 = vst.msk [vmem:[#allocation2 - $0x4] sm:$0xc0] %vm720, %v480
        %723 = vst.msk [vmem:[#allocation2 - $0x2] sm:$0xc0] %vm720, %v484
        %724 = vst.msk [vmem:[#allocation2] sm:$0xc0] %vm720, %v488
        %v725 = vld [vmem:[#allocation2] sm:$0xff]
        %v726 = vpack.c.bf16 %v725, %v725
        %728 = vrot.lane.b32.xlu0 %v726, 120
        %v729 = vpop.permute.xlu0 %728
        %v731 = vsel %vm496, %v726, 0
        %v734 = vsel %vm496, %v729, 0
        %736 = vmatpush.bf16.xpose.msra.mxu0 0
        %737 = vmatpush.bf16.xpose.msra.mxu0 0
        %738 = vmatpush.bf16.xpose.msra.mxu0 0
        %739 = vmatpush.bf16.xpose.msra.mxu0 0
        %740 = vmatpush.bf16.xpose.msra.mxu0 0
        %741 = vmatpush.bf16.xpose.msra.mxu0 0
        %742 = vmatpush.bf16.xpose.msra.mxu0 0
        %743 = vmatpush.bf16.xpose.msra.mxu0 %v734
        %744 = vmatmul.bf16.gmra.mxu0 %v731
        %v745 = vpop.f32.mrf.mxu0
        %v746 = vadd.f32 0.0, %v745
        %v747 = vpop.f32.mrf.mxu0
        %748 = vdwg.mxu0
        %v749 = vsel %vm496, %v746, -inf
        %750 = vmax.xlane.f32.xlu0 %v749
        %v751 = vpop.xlane.xlu0 %750
        %v752 = vsub.f32 %v746, %v751
        %v753 = vmul.f32 %v752, 1.442695
        %v754 = vpow.pop %v753
        %v755 = vsel %vm496, %v754, 0.0
        %756 = vadd.xlane.f32.xlu0 %v755
        %v757 = vpop.xlane.xlu0 %756
        %v758 = vrcp.pop %v757
        %v759 = vmul.f32 %v754, %v758
        %v760 = vpack.c.bf16 %v759, %v759
        %761 = vrot.lane.b32.xlu0 %v726, 112
        %v762 = vpop.permute.xlu0 %761
        %v764 = vsel %vm496, %v760, 0
        %v767 = vsel %vm533, %v762, 0
        %769 = vmatpush.bf16.msra.mxu0 0
        %770 = vmatpush.bf16.msra.mxu0 0
        %771 = vmatpush.bf16.msra.mxu0 0
        %772 = vmatpush.bf16.msra.mxu0 0
        %773 = vmatpush.bf16.msra.mxu0 0
        %774 = vmatpush.bf16.msra.mxu0 0
        %775 = vmatpush.bf16.msra.mxu0 0
        %776 = vmatpush.bf16.msra.mxu0 %v767
        %777 = vmatmul.bf16.gmra.mxu0 %v764
        %v778 = vpop.f32.mrf.mxu0
        %v779 = vadd.f32 0.0, %v778
        %v780 = vpop.f32.mrf.mxu0
        %781 = vdwg.mxu0
        %782 = vst.msk [vmem:[#allocation3 + $0x6] sm:$0x3] %vm550, %v779
        %784 = vrot.lane.b32.xlu0 %v779, 8
        %v785 = vpop.permute.xlu0 %784
        %787 = vst.msk [vmem:[#allocation3 + $0x4] sm:$0xc] %vm556, %v785
        %788 = vrot.lane.b32.xlu0 %v779, 16
        %v789 = vpop.permute.xlu0 %788
        %791 = vst.msk [vmem:[#allocation3 + $0x2] sm:$0x30] %vm561, %v789
        %792 = vrot.lane.b32.xlu0 %v779, 24
        %v793 = vpop.permute.xlu0 %792
        %795 = vst.msk [vmem:[#allocation3] sm:$0xc0] %vm566, %v793
        %v796 = vld [vmem:[#allocation3] sm:$0xff]
        %v797 = vpack.c.bf16 %v796, %v796
        %v798 = vld [vmem:[%s3] sm:$0xf]
        %v799 = vld [vmem:[%s3 + $0x4] sm:$0xf]
        %v800 = vld [vmem:[%s3 + $0x8] sm:$0xf]
        %v801 = vld [vmem:[%s3 + $0xc] sm:$0xf]
        %v802 = vld [vmem:[%s4] sm:$0x1]
        %v804 = vperm.slane %v802, 0
        %v810 = vunpack.c.l.b16 %v798
        %v811 = vunpack.c.l.b16 %v799
        %v812 = vunpack.c.l.b16 %v800
        %v813 = vunpack.c.l.b16 %v801
        %v814 = vpack.c.b16 %v811, %v810
        %v815 = vpack.c.b16 %v813, %v812
        %v819 = vsel %vm459, %v797, 0
        %821 = vmatpush.bf16.msra.mxu0 0
        %822 = vmatpush.bf16.msra.mxu0 0
        %823 = vmatpush.bf16.msra.mxu0 0
        %824 = vmatpush.bf16.msra.mxu0 0
        %825 = vmatpush.bf16.msra.mxu0 0
        %826 = vmatpush.bf16.msra.mxu0 0
        %827 = vmatpush.bf16.msra.mxu0 %v815
        %828 = vmatpush.bf16.msra.mxu0 %v814
        %829 = vmatmul.bf16.gmra.mxu0 %v819
        %v830 = vpop.f32.mrf.mxu0
        %v831 = vadd.f32 %v804, %v830
        %v832 = vpop.f32.mrf.mxu0
        %833 = vdwg.mxu0
        %v834 = vld [vmem:[%s5] sm:$0x1]
        %v835 = vld [vmem:[%s6] sm:$0x1]
        %v836 = vadd.f32 %v437, %v831
        %v837 = vsel %vm459, %v836, 0.0
        %838 = vadd.xlane.f32.xlu0 %v837
        %v839 = vpop.xlane.xlu0 %838
        %v840 = vrcp.pop 32.0
        %v841 = vmul.f32 32.0, %v840
        %v842 = vsub.f32 1.0, %v841
        %v843 = vmul.f32 %v840, %v842
        %v844 = vadd.f32 %v840, %v843
        %vm845 = vweird.f32 %v840
        %v846 = vsel %vm845, %v840, %v844
        %v847 = vmul.f32 %v839, %v846
        %v848 = vsub.f32 %v836, %v847
        %v849 = vmul.f32 %v848, %v848
        %v850 = vsel %vm459, %v849, 0.0
        %851 = vadd.xlane.f32.xlu0 %v850
        %v852 = vpop.xlane.xlu0 %851
        %v853 = vmul.f32 %v852, %v846
        %v854 = vadd.f32 %v853, 1e-05
        %v855 = vrsqrt.pop %v854
        %v856 = vmul.f32 %v855, %v854
        %v857 = vmul.f32 %v856, %v855
        %v858 = vmul.f32 0.5, %v857
        %v859 = vsub.f32 1.5, %v858
        %v860 = vmul.f32 %v855, %v859
        %vm861 = vweird.f32 %v854
        %vm862 = vweird.f32 %v855
        %vm863 = vmor %vm861, %vm862
        %v864 = vsel %vm863, %v855, %v860
        %v865 = vmul.f32 %v848, %v864
        %v867 = vperm.slane %v834, 0
        %v869 = vmul.f32 %v865, %v867
        %v871 = vperm.slane %v835, 0
        %v873 = vadd.f32 %v869, %v871
        %v874 = vpack.c.bf16 %v873, %v873
        %v875 = vld [vmem:[%s7] sm:$0xf]
        %v876 = vld [vmem:[%s7 + $0x4] sm:$0xf]
        %v877 = vld [vmem:[%s7 + $0x8] sm:$0xf]
        %v878 = vld [vmem:[%s7 + $0xc] sm:$0xf]
        %v879 = vld [vmem:[%s8] sm:$0x1]
        %v881 = vperm.slane %v879, 0
        %v887 = vunpack.c.l.b16 %v875
        %v888 = vunpack.c.l.b16 %v876
        %v889 = vunpack.c.l.b16 %v877
        %v890 = vunpack.c.l.b16 %v878
        %v891 = vpack.c.b16 %v888, %v887
        %v892 = vpack.c.b16 %v890, %v889
        %v896 = vsel %vm459, %v874, 0
        %898 = vmatpush.bf16.msra.mxu0 0
        %899 = vmatpush.bf16.msra.mxu0 0
        %900 = vmatpush.bf16.msra.mxu0 0
        %901 = vmatpush.bf16.msra.mxu0 0
        %902 = vmatpush.bf16.msra.mxu0 0
        %903 = vmatpush.bf16.msra.mxu0 0
        %904 = vmatpush.bf16.msra.mxu0 %v892
        %905 = vmatpush.bf16.msra.mxu0 %v891
        %906 = vmatmul.bf16.gmra.mxu0 %v896
        %v907 = vpop.f32.mrf.mxu0
        %v908 = vadd.f32 %v881, %v907
        %v909 = vpop.f32.mrf.mxu0
        %910 = vdwg.mxu0
        %v911 = vmul.f32 %v908, 0.5
        %v912 = vmul.f32 %v908, 0.70710677
        %v913 = vand.u32 2147483647, %v912
        %v914 = vmul.f32 %v913, 0.3275911
        %v915 = vadd.f32 %v914, 1.0
        %v916 = vrcp.pop %v915
        %v917 = vmul.f32 %v916, 1.0614054
        %v918 = vadd.f32 %v917, -1.4531521
        %v919 = vmul.f32 %v916, %v918
        %v920 = vadd.f32 %v919, 1.4214138
        %v921 = vmul.f32 %v916, %v920
        %v922 = vadd.f32 %v921, -0.28449672
        %v923 = vmul.f32 %v916, %v922
        %v924 = vadd.f32 %v923, 0.2548296
        %v925 = vmul.f32 %v916, %v924
        %v926 = vsub.f32 0.0, %v913
        %v927 = vmul.f32 %v926, %v913
        %v928 = vmul.f32 %v927, 1.442695
        %v929 = vpow.pop %v928
        %v930 = vmul.f32 %v925, %v929
        %v931 = vsub.f32 1.0, %v930
        %vm932 = vcmp.ge.f32.partialorder %v912, 0.0
        %v933 = vsub.f32 0.0, %v931
        %v934 = vsel %vm932, %v931, %v933
        %v935 = vadd.f32 %v934, 1.0
        %v936 = vmul.f32 %v911, %v935
        %v937 = vpack.c.bf16 %v936, %v936
        %v938 = vld [vmem:[%s9] sm:$0xf]
        %v939 = vld [vmem:[%s9 + $0x4] sm:$0xf]
        %v940 = vld [vmem:[%s9 + $0x8] sm:$0xf]
        %v941 = vld [vmem:[%s9 + $0xc] sm:$0xf]
        %v942 = vld [vmem:[%s9 + $0x10] sm:$0xf]
        %v943 = vld [vmem:[%s9 + $0x14] sm:$0xf]
        %v944 = vld [vmem:[%s9 + $0x18] sm:$0xf]
        %v945 = vld [vmem:[%s9 + $0x1c] sm:$0xf]
        %v946 = vld [vmem:[%s9 + $0x20] sm:$0xf]
        %v947 = vld [vmem:[%s9 + $0x24] sm:$0xf]
        %v948 = vld [vmem:[%s9 + $0x28] sm:$0xf]
        %v949 = vld [vmem:[%s9 + $0x2c] sm:$0xf]
        %v950 = vld [vmem:[%s9 + $0x30] sm:$0xf]
        %v951 = vld [vmem:[%s9 + $0x34] sm:$0xf]
        %v952 = vld [vmem:[%s9 + $0x38] sm:$0xf]
        %v953 = vld [vmem:[%s9 + $0x3c] sm:$0xf]
        %v954 = vld [vmem:[%s10] sm:$0x1]
        %v956 = vperm.slane %v954, 0
        %v974 = vunpack.c.l.b16 %v938
        %v975 = vunpack.c.l.b16 %v939
        %v976 = vunpack.c.l.b16 %v940
        %v977 = vunpack.c.l.b16 %v941
        %v978 = vunpack.c.l.b16 %v942
        %v979 = vunpack.c.l.b16 %v943
        %v980 = vunpack.c.l.b16 %v944
        %v981 = vunpack.c.l.b16 %v945
        %v982 = vunpack.c.l.b16 %v946
        %v983 = vunpack.c.l.b16 %v947
        %v984 = vunpack.c.l.b16 %v948
        %v985 = vunpack.c.l.b16 %v949
        %v986 = vunpack.c.l.b16 %v950
        %v987 = vunpack.c.l.b16 %v951
        %v988 = vunpack.c.l.b16 %v952
        %v989 = vunpack.c.l.b16 %v953
        %v990 = vpack.c.b16 %v975, %v974
        %v991 = vpack.c.b16 %v977, %v976
        %v992 = vpack.c.b16 %v979, %v978
        %v993 = vpack.c.b16 %v981, %v980
        %v994 = vpack.c.b16 %v983, %v982
        %v995 = vpack.c.b16 %v985, %v984
        %v996 = vpack.c.b16 %v987, %v986
        %v997 = vpack.c.b16 %v989, %v988
        %1006 = vmatpush.bf16.msra.mxu0 %v997
        %1007 = vmatpush.bf16.msra.mxu0 %v996
        %1008 = vmatpush.bf16.msra.mxu0 %v995
        %1009 = vmatpush.bf16.msra.mxu0 %v994
        %1010 = vmatpush.bf16.msra.mxu0 %v993
        %1011 = vmatpush.bf16.msra.mxu0 %v992
        %1012 = vmatpush.bf16.msra.mxu0 %v991
        %1013 = vmatpush.bf16.msra.mxu0 %v990
        %1014 = vmatmul.bf16.gmra.mxu0 %v937
        %v1015 = vpop.f32.mrf.mxu0
        %v1016 = vadd.f32 %v956, %v1015
        %v1017 = vpop.f32.mrf.mxu0
        %1018 = vdwg.mxu0
        %v1019 = vadd.f32 %v873, %v1016
        %v1020 = vsel %vm459, %v1019, 0.0
        %1021 = vadd.xlane.f32.xlu0 %v1020
        %v1022 = vpop.xlane.xlu0 %1021
        %v1023 = vmul.f32 %v1022, %v846
        %v1024 = vsub.f32 %v1019, %v1023
        %v1025 = vmul.f32 %v1024, %v1024
        %v1026 = vsel %vm459, %v1025, 0.0
        %1027 = vadd.xlane.f32.xlu0 %v1026
        %v1028 = vpop.xlane.xlu0 %1027
        %v1029 = vmul.f32 %v1028, %v846
        %v1030 = vadd.f32 %v1029, 1e-05
        %v1031 = vrsqrt.pop %v1030
        %v1032 = vmul.f32 %v1031, %v1030
        %v1033 = vmul.f32 %v1032, %v1031
        %v1034 = vmul.f32 0.5, %v1033
        %v1035 = vsub.f32 1.5, %v1034
        %v1036 = vmul.f32 %v1031, %v1035
        %vm1037 = vweird.f32 %v1030
        %vm1038 = vweird.f32 %v1031
        %vm1039 = vmor %vm1037, %vm1038
        %v1040 = vsel %vm1039, %v1031, %v1036
        %v1041 = vmul.f32 %v1024, %v1040
        %v1042 = vmul.f32 %v1041, %v867
        %v1043 = vadd.f32 %v1042, %v871
        %v1044 = vpack.c.bf16 %v1043, %v1043
        %v1045 = vld [vmem:[%s11] sm:$0xf]
        %v1046 = vld [vmem:[%s11 + $0x4] sm:$0xf]
        %v1047 = vld [vmem:[%s11 + $0x8] sm:$0xf]
        %v1048 = vld [vmem:[%s11 + $0xc] sm:$0xf]
        %v1049 = vld [vmem:[%s12] sm:$0x1]
        %v1051 = vperm.slane %v1049, 0
        %v1057 = vunpack.c.l.b16 %v1045
        %v1058 = vunpack.c.l.b16 %v1046
        %v1059 = vunpack.c.l.b16 %v1047
        %v1060 = vunpack.c.l.b16 %v1048
        %v1061 = vpack.c.b16 %v1058, %v1057
        %v1062 = vpack.c.b16 %v1060, %v1059
        %v1066 = vsel %vm459, %v1044, 0
        %1068 = vmatpush.bf16.msra.mxu0 0
        %1069 = vmatpush.bf16.msra.mxu0 0
        %1070 = vmatpush.bf16.msra.mxu0 0
        %1071 = vmatpush.bf16.msra.mxu0 0
        %1072 = vmatpush.bf16.msra.mxu0 0
        %1073 = vmatpush.bf16.msra.mxu0 0
        %1074 = vmatpush.bf16.msra.mxu0 %v1062
        %1075 = vmatpush.bf16.msra.mxu0 %v1061
        %1076 = vmatmul.bf16.gmra.mxu0 %v1066
        %v1077 = vpop.f32.mrf.mxu0
        %v1078 = vadd.f32 %v1051, %v1077
        %v1079 = vpop.f32.mrf.mxu0
        %1080 = vdwg.mxu0
        %1081 = vst [vmem:[%s431] sm:$0xff] %v1078
        %s1082 = sand.u32 %s313, 1
        %s1083 = scalar_lea.sflag [#allocation5], %s1082
        %s1084 = sand.u32 %s313, 1
        %s1085 = smul.addr %s1084, 8
        %s1086 = scalar_lea.vmem [#allocation4], %s1085
        // Predicated region
        $region73: #{tpu_custom_call.1} parent=71 // pred_check
          %p1087 = pneg %p323
        $region74: #{tpu_custom_call.1} parent=71 // pred_check_branch
          %1089 = sbr.rel (%p1087) target = $region76
        $region75: #{tpu_custom_call.1} parent=71 // pred_region
          %1091 = vsyncadd %s1083, 0
          %s1092 = smul.addr %s27, 8
          %s1093 = scalar_lea.hbm %s13, %s1092
          %s1095 = sshll.u32 %s1086, 4
          %s1096 = int_to_ptr.vmem [resolvable:$true] %s1095
          %s1097 = sshll.u32 %s1093, 4
          %s1098 = int_to_ptr.hbm [resolvable:$true] %s1097
          %1100 = dma.vmem_to_hbm [thread:$0]  %s1096, 128, %s1098, %s1083
        $region76: #{tpu_custom_call.1} parent=71 // pred_fallthru
          _
      $region72: #{tpu_custom_call.1} parent=5 // pred_fallthru
        _
      %p1101 = scmp.le.s32.totalorder 2, %s22
      // Predicated region
      $region77: #{tpu_custom_call.1} parent=5 // pred_check
        %p1102 = pneg %p1101
      $region78: #{tpu_custom_call.1} parent=5 // pred_check_branch
        %1104 = sbr.rel (%p1102) target = $region80
      $region79: #{tpu_custom_call.1} parent=5 // pred_region
        %s1105 = ssub.s32 %s22, 2
        // Predicated region
        $region81: #{tpu_custom_call.1} parent=79 // pred_check
          %p1106 = pneg %p329
        $region82: #{tpu_custom_call.1} parent=79 // pred_check_branch
          %1108 = sbr.rel (%p1106) target = $region84
        $region83: #{tpu_custom_call.1} parent=79 // pred_region
          %s1109 = sand.u32 %s314, 1
          %s1110 = scalar_lea.sflag [#allocation5], %s1109
          %s1111 = sand.u32 %s314, 1
          %s1112 = smul.addr %s1111, 8
          %s1113 = scalar_lea.vmem [#allocation4], %s1112
          %1115 = dma.done %s1110, 128
        $region84: #{tpu_custom_call.1} parent=79 // pred_fallthru
          _
      $region80: #{tpu_custom_call.1} parent=5 // pred_fallthru
        _
    $region6: #{tpu_custom_call.1} parent=1 // loop_footer
      %s26 = sadd.s32 1, %s22
    $region7: #{tpu_custom_call.1} parent=1 // loop_footer_branch
      %21 = sbr.rel target = $region3
    $region8: #{tpu_custom_call.1} parent=1 // loop_exit
      _
    %1116 = vsyncpa [#allocation5], 1
    %s1117 = scalar_lea.sflag [#allocation5], 1
    %1118 = vsyncpa %s1117, 1

</llo_original>
